<compile_context>
chip_gen: v5e
topology: v5e:2x2
jax: 0.10.0
libtpu: 0.0.40
codegen_flags: <defaults>
</compile_context>

<pallas_src>
import jax
import jax.numpy as jnp
from jax.experimental import pallas as pl
from jax.experimental.pallas import tpu as pltpu

_INV_SQRT_2 = 0.7071067811865475


def _erf_approx(x):
    # Abramowitz & Stegun 7.1.26 rational approximation, |err| <= 1.5e-7.
    # Used instead of lax.erf because erf is not a guaranteed Mosaic lowering.
    p = 0.3275911
    a1, a2, a3, a4, a5 = (0.254829592, -0.284496736, 1.421413741,
                          -1.453152027, 1.061405429)
    z = jnp.abs(x)
    t = 1.0 / (1.0 + p * z)
    poly = ((((a5 * t + a4) * t + a3) * t + a2) * t + a1) * t
    y = 1.0 - poly * jnp.exp(-z * z)
    return jnp.where(x >= 0, y, -y)


def _gelu_exact(x):
    # matches torch.nn.GELU() (erf formulation) to ~1.5e-7 abs
    return 0.5 * x * (1.0 + _erf_approx(x * _INV_SQRT_2))


# ---------------- fused Pallas kernel ----------------

def _make_repvit_kernel(C, H, W, PAD):
    HW = H * W

    def kernel(x_ref, w3_ref, a_ref, btok_ref, ml_ref, mr_ref,
               w1_ref, b1_ref, w2_ref, b2_ref, o_ref, pad_ref):
        # x_ref   : (1, C, HW)  one batch element, channels on sublanes, H*W on lanes
        # w3_ref  : (C, 9)      BN-fused depthwise 3x3 weights, tap index kh*3+kw
        # a_ref   : (C, 1)      fused per-channel scale = dw1x1_fused + 1 (identity)
        # btok_ref: (C, 1)      fused per-channel bias  = bn3_bias + bn1_bias
        # ml/mr   : (1, HW)     lane masks for the w-1 / w+1 taps (W boundary)
        # w1_ref  : (2C, C), b1_ref: (2C, 1), w2_ref: (C, 2C), b2_ref: (C, 1)
        # pad_ref : (C, HW + 2*PAD) VMEM scratch (zero halo for the 3x3 stencil)
        x = x_ref[0]                                   # (C, HW)

        # ---- token mixer: BN(dw3x3) + BN(dw1x1) + identity ------------------
        pad_ref[...] = jnp.zeros_like(pad_ref)         # zero halo (VMEM-only work)
        pad_ref[:, PAD:PAD + HW] = x

        ml = ml_ref[...]                               # (1, HW)
        mr = mr_ref[...]

        tok = x * a_ref[...] + btok_ref[...]           # dw1x1 branch + identity + biases
        for kh in range(3):
            for kw in range(3):
                s = (kh - 1) * W + (kw - 1)            # flattened-spatial shift
                tap = pad_ref[:, PAD + s:PAD + s + HW]
                if kw == 0:                            # source column w-1 invalid at w==0
                    tap = tap * ml
                elif kw == 2:                          # source column w+1 invalid at w==W-1
                    tap = tap * mr
                k = kh * 3 + kw
                tok = tok + tap * w3_ref[:, k:k + 1]

        # ---- channel mixer: tok + fc2(gelu(fc1(tok))) ------------------------
        h = jnp.dot(w1_ref[...], tok, preferred_element_type=jnp.float32) + b1_ref[...]
        h = _gelu_exact(h)
        y = jnp.dot(w2_ref[...], h, preferred_element_type=jnp.float32) + b2_ref[...]
        o_ref[0] = tok + y                             # Residual

    return kernel


# ---------------- wrapper ----------------

def repvit_block_forward(x_nchw, params):
    N, C, H, W = x_nchw.shape
    HW = H * W
    PAD = W + 1                       # halo wide enough for shifts in [-(W+1), W+1]
    hid = params["w1"].shape[0]

    # Free reshape: NCHW -> (N, C, H*W). No transpose / pad passes in HBM.
    x = x_nchw.reshape(N, C, HW)

    # Per-lane validity masks for the horizontal (w +/- 1) taps.
    wpos = jnp.arange(HW, dtype=jnp.int32) % W
    mask_l = (wpos > 0).astype(jnp.float32).reshape(1, HW)
    mask_r = (wpos < W - 1).astype(jnp.float32).reshape(1, HW)

    kernel = _make_repvit_kernel(C, H, W, PAD)

    out = pl.pallas_call(
        kernel,
        out_shape=jax.ShapeDtypeStruct((N, C, HW), jnp.float32),
        grid=(N,),
        in_specs=[
            pl.BlockSpec((1, C, HW), lambda n: (n, 0, 0)),
            pl.BlockSpec((C, 9), lambda n: (0, 0)),
            pl.BlockSpec((C, 1), lambda n: (0, 0)),
            pl.BlockSpec((C, 1), lambda n: (0, 0)),
            pl.BlockSpec((1, HW), lambda n: (0, 0)),
            pl.BlockSpec((1, HW), lambda n: (0, 0)),
            pl.BlockSpec((hid, C), lambda n: (0, 0)),
            pl.BlockSpec((hid, 1), lambda n: (0, 0)),
            pl.BlockSpec((C, hid), lambda n: (0, 0)),
            pl.BlockSpec((C, 1), lambda n: (0, 0)),
        ],
        out_specs=pl.BlockSpec((1, C, HW), lambda n: (n, 0, 0)),
        scratch_shapes=[pltpu.VMEM((C, HW + 2 * PAD), jnp.float32)],
        compiler_params=pltpu.CompilerParams(
            dimension_semantics=("parallel",),
        ),
    )(x, params["w3"], params["a"], params["b_tok"], mask_l, mask_r,
      params["w1"], params["b1"], params["w2"], params["b2"])

    return out.reshape(N, C, H, W)


# ---------------- deterministic parameter construction ----------------

def _fuse_conv_bn(w_oihw, gamma, beta, mean, var, eps=1e-5):
    # eval-mode BN folded into the preceding bias-free conv (exact identity)
    scale = gamma / jnp.sqrt(var + eps)
    return w_oihw * scale[:, None, None, None], beta - mean * scale


def make_params(key, inp):
    hidden, oup = 2 * inp, inp
    ks = jax.random.split(key, 8)

    def bn(k, ch):
        k1, k2, k3, k4 = jax.random.split(k, 4)
        gamma = 1.0 + 0.1 * jax.random.normal(k1, (ch,), jnp.float32)
        beta = 0.1 * jax.random.normal(k2, (ch,), jnp.float32)
        mean = 0.1 * jax.random.normal(k3, (ch,), jnp.float32)
        var = 0.5 + jax.random.uniform(k4, (ch,), jnp.float32)
        return gamma, beta, mean, var

    # PyTorch OIHW conv weights (shapes from the module __init__)
    w_dw3 = 0.2 * jax.random.normal(ks[0], (inp, 1, 3, 3), jnp.float32)   # RepVGGDW.conv
    w_dw1 = 0.2 * jax.random.normal(ks[1], (inp, 1, 1, 1), jnp.float32)   # RepVGGDW.conv1
    w_fc1 = jax.random.normal(ks[2], (hidden, inp, 1, 1), jnp.float32) / jnp.sqrt(inp)
    w_fc2 = jax.random.normal(ks[3], (oup, hidden, 1, 1), jnp.float32) / jnp.sqrt(hidden)

    # Deterministic pseudo-random BN statistics so the whole fused path is exercised.
    w3f, b3f = _fuse_conv_bn(w_dw3, *bn(ks[4], inp))
    w1f, b1f = _fuse_conv_bn(w_dw1, *bn(ks[5], inp))
    wf1, bf1 = _fuse_conv_bn(w_fc1, *bn(ks[6], hidden))
    wf2, bf2 = _fuse_conv_bn(w_fc2, *bn(ks[7], oup))

    return {
        # token mixer (RepVGGDW): y = dwconv3x3(x) + dw1x1(x) + x  (BN folded)
        "w3": w3f[:, 0].reshape(inp, 9),                 # (C, 9), tap index kh*3+kw
        "a": (w1f[:, 0, 0, 0] + 1.0).reshape(inp, 1),    # dw1x1 scale + identity
        "b_tok": (b3f + b1f).reshape(inp, 1),
        # channel mixer: x + fc2(gelu(fc1(x)))
        "w1": wf1[:, :, 0, 0],                           # (2C, C)
        "b1": bf1.reshape(hidden, 1),
        "w2": wf2[:, :, 0, 0],                           # (C, 2C)
        "b2": bf2.reshape(oup, 1),
    }


# ---------------- plain-JAX reference (in-script sanity check) ----------------

def reference_forward(x_nchw, params):
    N, C, H, W = x_nchw.shape
    x = jnp.transpose(x_nchw, (0, 2, 3, 1))                      # NHWC
    w3 = params["w3"].reshape(C, 3, 3)
    rhs = jnp.transpose(w3, (1, 2, 0))[:, :, None, :]            # (3,3,1,C) HWIO depthwise
    y = jax.lax.conv_general_dilated(
        x, rhs, (1, 1), "SAME",
        dimension_numbers=("NHWC", "HWIO", "NHWC"),
        feature_group_count=C,
        precision=jax.lax.Precision.HIGHEST)
    t = y + x * params["a"][:, 0] + params["b_tok"][:, 0]
    tf = t.reshape(-1, C)
    h = jax.nn.gelu(
        jnp.dot(tf, params["w1"].T, precision=jax.lax.Precision.HIGHEST)
        + params["b1"][:, 0], approximate=False)
    z = (tf
         + jnp.dot(h, params["w2"].T, precision=jax.lax.Precision.HIGHEST)
         + params["b2"][:, 0])
    out = z.reshape(N, H, W, C)
    return jnp.transpose(out, (0, 3, 1, 2))


if __name__ == "__main__":
    key = jax.random.PRNGKey(0)
    k_x, k_p = jax.random.split(key)
    # RepViTBlock(inp=16, hidden_dim=32, oup=16, kernel_size=3, stride=1,
    #             use_se=False, use_hs=True), eval mode.
    N, C, H, W = 2, 16, 16, 16
    x = jax.random.normal(k_x, (N, C, H, W), jnp.float32)
    params = make_params(k_p, C)

    out = repvit_block_forward(x, params)
    out = jax.block_until_ready(out)

    ref = reference_forward(x, params)
    assert out.shape == (N, C, H, W)
    max_err = float(jnp.max(jnp.abs(out - ref)))
    assert max_err < 1e-3, f"mismatch vs plain-JAX reference: {max_err}"
    print("KERNEL_OK")
</pallas_src>

<mosaic_0001>
module attributes {stable_mosaic.version = 11 : i64} {
  func.func @kernel(%arg0: i32, %arg1: memref<1x16x256xf32, #tpu.memory_space<vmem>>, %arg2: memref<16x9xf32, #tpu.memory_space<vmem>>, %arg3: memref<16x1xf32, #tpu.memory_space<vmem>>, %arg4: memref<16x1xf32, #tpu.memory_space<vmem>>, %arg5: memref<1x256xf32, #tpu.memory_space<vmem>>, %arg6: memref<1x256xf32, #tpu.memory_space<vmem>>, %arg7: memref<32x16xf32, #tpu.memory_space<vmem>>, %arg8: memref<32x1xf32, #tpu.memory_space<vmem>>, %arg9: memref<16x32xf32, #tpu.memory_space<vmem>>, %arg10: memref<16x1xf32, #tpu.memory_space<vmem>>, %arg11: memref<1x16x256xf32, #tpu.memory_space<vmem>>, %arg12: memref<16x290xf32, #tpu.memory_space<vmem>>) attributes {dimension_semantics = [#tpu.dimension_semantics<parallel>], iteration_bounds = array<i64: 2>, scalar_prefetch = 0 : i64, scratch_operands = 1 : i64, tpu.core_type = #tpu.core_type<tc>, window_params = [{transform_indices = @transform_0, window_bounds = array<i64: 1, 16, 256>}, {pipeline_mode = #tpu.pipeline_mode<synchronous>, transform_indices = @transform_1, window_bounds = array<i64: 16, 9>}, {pipeline_mode = #tpu.pipeline_mode<synchronous>, transform_indices = @transform_2, window_bounds = array<i64: 16, 1>}, {pipeline_mode = #tpu.pipeline_mode<synchronous>, transform_indices = @transform_3, window_bounds = array<i64: 16, 1>}, {pipeline_mode = #tpu.pipeline_mode<synchronous>, transform_indices = @transform_4, window_bounds = array<i64: 1, 256>}, {pipeline_mode = #tpu.pipeline_mode<synchronous>, transform_indices = @transform_5, window_bounds = array<i64: 1, 256>}, {pipeline_mode = #tpu.pipeline_mode<synchronous>, transform_indices = @transform_6, window_bounds = array<i64: 32, 16>}, {pipeline_mode = #tpu.pipeline_mode<synchronous>, transform_indices = @transform_7, window_bounds = array<i64: 32, 1>}, {pipeline_mode = #tpu.pipeline_mode<synchronous>, transform_indices = @transform_8, window_bounds = array<i64: 16, 32>}, {pipeline_mode = #tpu.pipeline_mode<synchronous>, transform_indices = @transform_9, window_bounds = array<i64: 16, 1>}, {transform_indices = @transform_10, window_bounds = array<i64: 1, 16, 256>}]} {
    %c0 = arith.constant 0 : index
    %c0_0 = arith.constant 0 : index
    %c0_1 = arith.constant 0 : index
    %0 = vector.load %arg1[%c0, %c0_0, %c0_1] : memref<1x16x256xf32, #tpu.memory_space<vmem>>, vector<1x16x256xf32>
    %1 = vector.shape_cast %0 : vector<1x16x256xf32> to vector<16x256xf32>
    %cst = arith.constant 0.000000e+00 : f32
    %2 = vector.broadcast %cst : f32 to vector<16x290xf32>
    %c0_2 = arith.constant 0 : index
    %c0_3 = arith.constant 0 : index
    %3 = vector.load %arg12[%c0_2, %c0_3] : memref<16x290xf32, #tpu.memory_space<vmem>>, vector<16x290xf32>
    tpu.vector_store %arg12[%c0_2, %c0_3], %2 {strides = array<i32>} : memref<16x290xf32, #tpu.memory_space<vmem>>, vector<16x290xf32>,
    %c0_4 = arith.constant 0 : index
    %c17 = arith.constant 17 : index
    %4 = vector.load %arg12[%c0_4, %c17] : memref<16x290xf32, #tpu.memory_space<vmem>>, vector<16x256xf32>
    tpu.vector_store %arg12[%c0_4, %c17], %1 {strides = array<i32>} : memref<16x290xf32, #tpu.memory_space<vmem>>, vector<16x256xf32>,
    %c0_5 = arith.constant 0 : index
    %c0_6 = arith.constant 0 : index
    %5 = vector.load %arg5[%c0_5, %c0_6] : memref<1x256xf32, #tpu.memory_space<vmem>>, vector<1x256xf32>
    %c0_7 = arith.constant 0 : index
    %c0_8 = arith.constant 0 : index
    %6 = vector.load %arg6[%c0_7, %c0_8] : memref<1x256xf32, #tpu.memory_space<vmem>>, vector<1x256xf32>
    %c0_9 = arith.constant 0 : index
    %c0_10 = arith.constant 0 : index
    %7 = vector.load %arg3[%c0_9, %c0_10] : memref<16x1xf32, #tpu.memory_space<vmem>>, vector<16x1xf32>
    %8 = vector.broadcast %7 : vector<16x1xf32> to vector<16x256xf32>
    %9 = arith.mulf %1, %8 : vector<16x256xf32>
    %c0_11 = arith.constant 0 : index
    %c0_12 = arith.constant 0 : index
    %10 = vector.load %arg4[%c0_11, %c0_12] : memref<16x1xf32, #tpu.memory_space<vmem>>, vector<16x1xf32>
    %11 = vector.broadcast %10 : vector<16x1xf32> to vector<16x256xf32>
    %12 = arith.addf %9, %11 : vector<16x256xf32>
    %c0_13 = arith.constant 0 : index
    %c0_14 = arith.constant 0 : index
    %13 = vector.load %arg12[%c0_13, %c0_14] : memref<16x290xf32, #tpu.memory_space<vmem>>, vector<16x256xf32>
    %14 = vector.broadcast %5 : vector<1x256xf32> to vector<16x256xf32>
    %15 = arith.mulf %13, %14 : vector<16x256xf32>
    %c0_15 = arith.constant 0 : index
    %c0_16 = arith.constant 0 : index
    %16 = vector.load %arg2[%c0_15, %c0_16] : memref<16x9xf32, #tpu.memory_space<vmem>>, vector<16x1xf32>
    %17 = vector.broadcast %16 : vector<16x1xf32> to vector<16x256xf32>
    %18 = arith.mulf %15, %17 : vector<16x256xf32>
    %19 = arith.addf %12, %18 : vector<16x256xf32>
    %c0_17 = arith.constant 0 : index
    %c1 = arith.constant 1 : index
    %20 = vector.load %arg12[%c0_17, %c1] : memref<16x290xf32, #tpu.memory_space<vmem>>, vector<16x256xf32>
    %c0_18 = arith.constant 0 : index
    %c1_19 = arith.constant 1 : index
    %21 = vector.load %arg2[%c0_18, %c1_19] : memref<16x9xf32, #tpu.memory_space<vmem>>, vector<16x1xf32>
    %22 = vector.broadcast %21 : vector<16x1xf32> to vector<16x256xf32>
    %23 = arith.mulf %20, %22 : vector<16x256xf32>
    %24 = arith.addf %19, %23 : vector<16x256xf32>
    %c0_20 = arith.constant 0 : index
    %c2 = arith.constant 2 : index
    %25 = vector.load %arg12[%c0_20, %c2] : memref<16x290xf32, #tpu.memory_space<vmem>>, vector<16x256xf32>
    %26 = vector.broadcast %6 : vector<1x256xf32> to vector<16x256xf32>
    %27 = arith.mulf %25, %26 : vector<16x256xf32>
    %c0_21 = arith.constant 0 : index
    %c2_22 = arith.constant 2 : index
    %28 = vector.load %arg2[%c0_21, %c2_22] : memref<16x9xf32, #tpu.memory_space<vmem>>, vector<16x1xf32>
    %29 = vector.broadcast %28 : vector<16x1xf32> to vector<16x256xf32>
    %30 = arith.mulf %27, %29 : vector<16x256xf32>
    %31 = arith.addf %24, %30 : vector<16x256xf32>
    %c0_23 = arith.constant 0 : index
    %c16 = arith.constant 16 : index
    %32 = vector.load %arg12[%c0_23, %c16] : memref<16x290xf32, #tpu.memory_space<vmem>>, vector<16x256xf32>
    %33 = vector.broadcast %5 : vector<1x256xf32> to vector<16x256xf32>
    %34 = arith.mulf %32, %33 : vector<16x256xf32>
    %c0_24 = arith.constant 0 : index
    %c3 = arith.constant 3 : index
    %35 = vector.load %arg2[%c0_24, %c3] : memref<16x9xf32, #tpu.memory_space<vmem>>, vector<16x1xf32>
    %36 = vector.broadcast %35 : vector<16x1xf32> to vector<16x256xf32>
    %37 = arith.mulf %34, %36 : vector<16x256xf32>
    %38 = arith.addf %31, %37 : vector<16x256xf32>
    %c0_25 = arith.constant 0 : index
    %c17_26 = arith.constant 17 : index
    %39 = vector.load %arg12[%c0_25, %c17_26] : memref<16x290xf32, #tpu.memory_space<vmem>>, vector<16x256xf32>
    %c0_27 = arith.constant 0 : index
    %c4 = arith.constant 4 : index
    %40 = vector.load %arg2[%c0_27, %c4] : memref<16x9xf32, #tpu.memory_space<vmem>>, vector<16x1xf32>
    %41 = vector.broadcast %40 : vector<16x1xf32> to vector<16x256xf32>
    %42 = arith.mulf %39, %41 : vector<16x256xf32>
    %43 = arith.addf %38, %42 : vector<16x256xf32>
    %c0_28 = arith.constant 0 : index
    %c18 = arith.constant 18 : index
    %44 = vector.load %arg12[%c0_28, %c18] : memref<16x290xf32, #tpu.memory_space<vmem>>, vector<16x256xf32>
    %45 = vector.broadcast %6 : vector<1x256xf32> to vector<16x256xf32>
    %46 = arith.mulf %44, %45 : vector<16x256xf32>
    %c0_29 = arith.constant 0 : index
    %c5 = arith.constant 5 : index
    %47 = vector.load %arg2[%c0_29, %c5] : memref<16x9xf32, #tpu.memory_space<vmem>>, vector<16x1xf32>
    %48 = vector.broadcast %47 : vector<16x1xf32> to vector<16x256xf32>
    %49 = arith.mulf %46, %48 : vector<16x256xf32>
    %50 = arith.addf %43, %49 : vector<16x256xf32>
    %c0_30 = arith.constant 0 : index
    %c32 = arith.constant 32 : index
    %51 = vector.load %arg12[%c0_30, %c32] : memref<16x290xf32, #tpu.memory_space<vmem>>, vector<16x256xf32>
    %52 = vector.broadcast %5 : vector<1x256xf32> to vector<16x256xf32>
    %53 = arith.mulf %51, %52 : vector<16x256xf32>
    %c0_31 = arith.constant 0 : index
    %c6 = arith.constant 6 : index
    %54 = vector.load %arg2[%c0_31, %c6] : memref<16x9xf32, #tpu.memory_space<vmem>>, vector<16x1xf32>
    %55 = vector.broadcast %54 : vector<16x1xf32> to vector<16x256xf32>
    %56 = arith.mulf %53, %55 : vector<16x256xf32>
    %57 = arith.addf %50, %56 : vector<16x256xf32>
    %c0_32 = arith.constant 0 : index
    %c33 = arith.constant 33 : index
    %58 = vector.load %arg12[%c0_32, %c33] : memref<16x290xf32, #tpu.memory_space<vmem>>, vector<16x256xf32>
    %c0_33 = arith.constant 0 : index
    %c7 = arith.constant 7 : index
    %59 = vector.load %arg2[%c0_33, %c7] : memref<16x9xf32, #tpu.memory_space<vmem>>, vector<16x1xf32>
    %60 = vector.broadcast %59 : vector<16x1xf32> to vector<16x256xf32>
    %61 = arith.mulf %58, %60 : vector<16x256xf32>
    %62 = arith.addf %57, %61 : vector<16x256xf32>
    %c0_34 = arith.constant 0 : index
    %c34 = arith.constant 34 : index
    %63 = vector.load %arg12[%c0_34, %c34] : memref<16x290xf32, #tpu.memory_space<vmem>>, vector<16x256xf32>
    %64 = vector.broadcast %6 : vector<1x256xf32> to vector<16x256xf32>
    %65 = arith.mulf %63, %64 : vector<16x256xf32>
    %c0_35 = arith.constant 0 : index
    %c8 = arith.constant 8 : index
    %66 = vector.load %arg2[%c0_35, %c8] : memref<16x9xf32, #tpu.memory_space<vmem>>, vector<16x1xf32>
    %67 = vector.broadcast %66 : vector<16x1xf32> to vector<16x256xf32>
    %68 = arith.mulf %65, %67 : vector<16x256xf32>
    %69 = arith.addf %62, %68 : vector<16x256xf32>
    %c0_36 = arith.constant 0 : index
    %c0_37 = arith.constant 0 : index
    %70 = vector.load %arg7[%c0_36, %c0_37] : memref<32x16xf32, #tpu.memory_space<vmem>>, vector<32x16xf32>
    %cst_38 = arith.constant dense<0.000000e+00> : vector<32x256xf32>
    %71 = tpu.matmul %70, %69, %cst_38 {dimension_numbers = #tpu.dot_dimension_numbers<[1], [0], [0], [1], [0, 0, 1, 1], [], []>} : vector<32x16xf32>, vector<16x256xf32>, vector<32x256xf32> -> vector<32x256xf32>
    %c0_39 = arith.constant 0 : index
    %c0_40 = arith.constant 0 : index
    %72 = vector.load %arg8[%c0_39, %c0_40] : memref<32x1xf32, #tpu.memory_space<vmem>>, vector<32x1xf32>
    %73 = vector.broadcast %72 : vector<32x1xf32> to vector<32x256xf32>
    %74 = arith.addf %71, %73 : vector<32x256xf32>
    %cst_41 = arith.constant 5.000000e-01 : f32
    %75 = vector.broadcast %cst_41 : f32 to vector<32x256xf32>
    %76 = arith.mulf %75, %74 : vector<32x256xf32>
    %cst_42 = arith.constant 0.707106769 : f32
    %77 = vector.broadcast %cst_42 : f32 to vector<32x256xf32>
    %78 = arith.mulf %74, %77 : vector<32x256xf32>
    %79 = math.absf %78 : vector<32x256xf32>
    %cst_43 = arith.constant 0.327591091 : f32
    %80 = vector.broadcast %cst_43 : f32 to vector<32x256xf32>
    %81 = arith.mulf %80, %79 : vector<32x256xf32>
    %cst_44 = arith.constant 1.000000e+00 : f32
    %82 = vector.broadcast %cst_44 : f32 to vector<32x256xf32>
    %83 = arith.addf %82, %81 : vector<32x256xf32>
    %cst_45 = arith.constant 1.000000e+00 : f32
    %84 = vector.broadcast %cst_45 : f32 to vector<32x256xf32>
    %85 = arith.divf %84, %83 : vector<32x256xf32>
    %cst_46 = arith.constant 1.06140542 : f32
    %86 = vector.broadcast %cst_46 : f32 to vector<32x256xf32>
    %87 = arith.mulf %86, %85 : vector<32x256xf32>
    %cst_47 = arith.constant -1.45315206 : f32
    %88 = vector.broadcast %cst_47 : f32 to vector<32x256xf32>
    %89 = arith.addf %87, %88 : vector<32x256xf32>
    %90 = arith.mulf %89, %85 : vector<32x256xf32>
    %cst_48 = arith.constant 1.42141378 : f32
    %91 = vector.broadcast %cst_48 : f32 to vector<32x256xf32>
    %92 = arith.addf %90, %91 : vector<32x256xf32>
    %93 = arith.mulf %92, %85 : vector<32x256xf32>
    %cst_49 = arith.constant -0.284496725 : f32
    %94 = vector.broadcast %cst_49 : f32 to vector<32x256xf32>
    %95 = arith.addf %93, %94 : vector<32x256xf32>
    %96 = arith.mulf %95, %85 : vector<32x256xf32>
    %cst_50 = arith.constant 0.254829586 : f32
    %97 = vector.broadcast %cst_50 : f32 to vector<32x256xf32>
    %98 = arith.addf %96, %97 : vector<32x256xf32>
    %99 = arith.mulf %98, %85 : vector<32x256xf32>
    %cst_51 = arith.constant 0.000000e+00 : f32
    %100 = vector.broadcast %cst_51 : f32 to vector<32x256xf32>
    %101 = arith.subf %100, %79 : vector<32x256xf32>
    %102 = arith.mulf %101, %79 : vector<32x256xf32>
    %103 = math.exp %102 : vector<32x256xf32>
    %104 = arith.mulf %99, %103 : vector<32x256xf32>
    %cst_52 = arith.constant 1.000000e+00 : f32
    %105 = vector.broadcast %cst_52 : f32 to vector<32x256xf32>
    %106 = arith.subf %105, %104 : vector<32x256xf32>
    %cst_53 = arith.constant 0.000000e+00 : f32
    %107 = vector.broadcast %cst_53 : f32 to vector<32x256xf32>
    %108 = arith.cmpf oge, %78, %107 : vector<32x256xf32>
    %cst_54 = arith.constant 0.000000e+00 : f32
    %109 = vector.broadcast %cst_54 : f32 to vector<32x256xf32>
    %110 = arith.subf %109, %106 : vector<32x256xf32>
    %111 = arith.select %108, %106, %110 : vector<32x256xi1>, vector<32x256xf32>
    %cst_55 = arith.constant 1.000000e+00 : f32
    %112 = vector.broadcast %cst_55 : f32 to vector<32x256xf32>
    %113 = arith.addf %112, %111 : vector<32x256xf32>
    %114 = arith.mulf %76, %113 : vector<32x256xf32>
    %c0_56 = arith.constant 0 : index
    %c0_57 = arith.constant 0 : index
    %115 = vector.load %arg9[%c0_56, %c0_57] : memref<16x32xf32, #tpu.memory_space<vmem>>, vector<16x32xf32>
    %cst_58 = arith.constant dense<0.000000e+00> : vector<16x256xf32>
    %116 = tpu.matmul %115, %114, %cst_58 {dimension_numbers = #tpu.dot_dimension_numbers<[1], [0], [0], [1], [0, 0, 1, 1], [], []>} : vector<16x32xf32>, vector<32x256xf32>, vector<16x256xf32> -> vector<16x256xf32>
    %c0_59 = arith.constant 0 : index
    %c0_60 = arith.constant 0 : index
    %117 = vector.load %arg10[%c0_59, %c0_60] : memref<16x1xf32, #tpu.memory_space<vmem>>, vector<16x1xf32>
    %118 = vector.broadcast %117 : vector<16x1xf32> to vector<16x256xf32>
    %119 = arith.addf %116, %118 : vector<16x256xf32>
    %120 = arith.addf %69, %119 : vector<16x256xf32>
    %c0_61 = arith.constant 0 : index
    %c0_62 = arith.constant 0 : index
    %c0_63 = arith.constant 0 : index
    %121 = vector.load %arg11[%c0_61, %c0_62, %c0_63] : memref<1x16x256xf32, #tpu.memory_space<vmem>>, vector<1x16x256xf32>
    %122 = vector.shape_cast %121 : vector<1x16x256xf32> to vector<16x256xf32>
    %123 = vector.shape_cast %120 : vector<16x256xf32> to vector<1x16x256xf32>
    tpu.vector_store %arg11[%c0_61, %c0_62, %c0_63], %123 {strides = array<i32>} : memref<1x16x256xf32, #tpu.memory_space<vmem>>, vector<1x16x256xf32>,
    return
  }
  func.func @transform_0(%arg0: i32) -> (i32, i32, i32) {
    %c0_i32 = arith.constant 0 : i32
    %c0_i32_0 = arith.constant 0 : i32
    %c0_i32_1 = arith.constant 0 : i32
    return %arg0, %c0_i32, %c0_i32_0 : i32, i32, i32
  }
  func.func @transform_1(%arg0: i32) -> (i32, i32) {
    %c0_i32 = arith.constant 0 : i32
    %c0_i32_0 = arith.constant 0 : i32
    %c0_i32_1 = arith.constant 0 : i32
    return %c0_i32, %c0_i32_0 : i32, i32
  }
  func.func @transform_2(%arg0: i32) -> (i32, i32) {
    %c0_i32 = arith.constant 0 : i32
    %c0_i32_0 = arith.constant 0 : i32
    %c0_i32_1 = arith.constant 0 : i32
    return %c0_i32, %c0_i32_0 : i32, i32
  }
  func.func @transform_3(%arg0: i32) -> (i32, i32) {
    %c0_i32 = arith.constant 0 : i32
    %c0_i32_0 = arith.constant 0 : i32
    %c0_i32_1 = arith.constant 0 : i32
    return %c0_i32, %c0_i32_0 : i32, i32
  }
  func.func @transform_4(%arg0: i32) -> (i32, i32) {
    %c0_i32 = arith.constant 0 : i32
    %c0_i32_0 = arith.constant 0 : i32
    %c0_i32_1 = arith.constant 0 : i32
    return %c0_i32, %c0_i32_0 : i32, i32
  }
  func.func @transform_5(%arg0: i32) -> (i32, i32) {
    %c0_i32 = arith.constant 0 : i32
    %c0_i32_0 = arith.constant 0 : i32
    %c0_i32_1 = arith.constant 0 : i32
    return %c0_i32, %c0_i32_0 : i32, i32
  }
  func.func @transform_6(%arg0: i32) -> (i32, i32) {
    %c0_i32 = arith.constant 0 : i32
    %c0_i32_0 = arith.constant 0 : i32
    %c0_i32_1 = arith.constant 0 : i32
    return %c0_i32, %c0_i32_0 : i32, i32
  }
  func.func @transform_7(%arg0: i32) -> (i32, i32) {
    %c0_i32 = arith.constant 0 : i32
    %c0_i32_0 = arith.constant 0 : i32
    %c0_i32_1 = arith.constant 0 : i32
    return %c0_i32, %c0_i32_0 : i32, i32
  }
  func.func @transform_8(%arg0: i32) -> (i32, i32) {
    %c0_i32 = arith.constant 0 : i32
    %c0_i32_0 = arith.constant 0 : i32
    %c0_i32_1 = arith.constant 0 : i32
    return %c0_i32, %c0_i32_0 : i32, i32
  }
  func.func @transform_9(%arg0: i32) -> (i32, i32) {
    %c0_i32 = arith.constant 0 : i32
    %c0_i32_0 = arith.constant 0 : i32
    %c0_i32_1 = arith.constant 0 : i32
    return %c0_i32, %c0_i32_0 : i32, i32
  }
  func.func @transform_10(%arg0: i32) -> (i32, i32, i32) {
    %c0_i32 = arith.constant 0 : i32
    %c0_i32_0 = arith.constant 0 : i32
    %c0_i32_1 = arith.constant 0 : i32
    return %arg0, %c0_i32, %c0_i32_0 : i32, i32, i32
  }
}

</mosaic_0001>

<llo_original>
// kernel: tpu_custom_call.1
$region0: #{tpu_custom_call.1}
  #allocation0 [shape = 'u32[]', space=smem, size = 0x4, offset = 0x4, fixed_abs, tag = 'smem constant byte address 0x4 - core index']
  #allocation1 [shape = 'u32[72,128]{1,0:T(1,128)}', space=vmem, size = 0x9000, scoped, tag = 'internal scratch']
  #allocation2 [shape = 'f32[16,290]{1,0:T(8,128)}', space=vmem, size = 0x6000, scoped, tag = 'scratch operand']
  %s0 = inlined_call_operand.vmem [shape: f32[2,16,256], index: 0, kind: input, shape index: {}]
  %s1 = inlined_call_operand.vmem [shape: f32[16,9], index: 1, kind: input, shape index: {}]
  %s2 = inlined_call_operand.vmem [shape: f32[16,1], index: 2, kind: input, shape index: {}]
  %s3 = inlined_call_operand.vmem [shape: f32[16,1], index: 3, kind: input, shape index: {}]
  %s4 = inlined_call_operand.vmem [shape: f32[1,256], index: 4, kind: input, shape index: {}]
  %s5 = inlined_call_operand.vmem [shape: f32[1,256], index: 5, kind: input, shape index: {}]
  %s6 = inlined_call_operand.vmem [shape: f32[32,16], index: 6, kind: input, shape index: {}]
  %s7 = inlined_call_operand.vmem [shape: f32[32,1], index: 7, kind: input, shape index: {}]
  %s8 = inlined_call_operand.vmem [shape: f32[16,32], index: 8, kind: input, shape index: {}]
  %s9 = inlined_call_operand.vmem [shape: f32[16,1], index: 9, kind: input, shape index: {}]
  %s10 = inlined_call_operand.hbm [shape: f32[2,16,256], index: 10, kind: output, shape index: {}]
  %s11 = sld [smem:[#allocation0]]
  $region73: #{tpu_custom_call.1} parent=0
    _
  %s13 = ssub.s32 1, %s11
  %s14 = scalar_select 0, %s13, %s11
  $region1: #{tpu_custom_call.1} parent=0
    #allocation3 [shape = 'u8[32768]{0}', space=vmem, size = 0x8000, scoped, tag = 'output window, operand 0']
    #allocation4 [shape = 's32[2]{0}', space=sflag, size = 0x8, scoped, tag = 'scoped memory for tpu_custom_call.1']
    %15 = vsyncpa [#allocation4], 0
    %s16 = scalar_lea.sflag [#allocation4], 1
    %17 = vsyncpa %s16, 0
    loop: start=0, step=1, limit=4
    $region2: #{tpu_custom_call.1} parent=1 // loop_pre_header
      _
    $region3: #{tpu_custom_call.1} parent=1 // loop_header
      %s19 = sphi 0, %s23
      %p20 = scmp.ge.s32.totalorder %s19, 4
      %s29 = sphi 0, %s31
      %s32 = sphi 0, %s29
      %s33 = sphi 0, %s32
      %s49 = sphi 0, %s33
      %s53 = sphi 0, %s53
      %s55 = sphi 0, %s53
      %s56 = sphi 0, %s55
      %s70 = sphi 0, %s56
      %s74 = sphi 0, %s74
      %s76 = sphi 0, %s74
      %s77 = sphi 0, %s76
      %s91 = sphi 0, %s77
      %s95 = sphi 0, %s95
      %s97 = sphi 0, %s95
      %s98 = sphi 0, %s97
      %s112 = sphi 0, %s98
      %s116 = sphi 0, %s116
      %s118 = sphi 0, %s116
      %s119 = sphi 0, %s118
      %s133 = sphi 0, %s119
      %s137 = sphi 0, %s137
      %s139 = sphi 0, %s137
      %s140 = sphi 0, %s139
      %s154 = sphi 0, %s140
      %s158 = sphi 0, %s158
      %s160 = sphi 0, %s158
      %s161 = sphi 0, %s160
      %s175 = sphi 0, %s161
      %s179 = sphi 0, %s179
      %s181 = sphi 0, %s179
      %s182 = sphi 0, %s181
      %s196 = sphi 0, %s182
      %s200 = sphi 0, %s200
      %s202 = sphi 0, %s200
      %s203 = sphi 0, %s202
      %s217 = sphi 0, %s203
      %s221 = sphi 0, %s221
      %s223 = sphi 0, %s221
      %s224 = sphi 0, %s223
      %s238 = sphi 0, %s224
      %s244 = sphi 0, %s246
      %s247 = sphi 0, %s244
      %s248 = sphi 0, %s247
      %s264 = sphi 0, %s248
    $region4: #{tpu_custom_call.1} parent=1 // loop_header_branch
      %22 = sbr.rel (%p20) target = $region8
    $region5: #{tpu_custom_call.1} parent=1 // loop_body
      %s24 = ssub.s32 %s19, 1
      %s25 = ssub.s32 %s19, 2
      %s26 = sadd.s32 %s19, 1
      %s27 = ssub.s32 %s19, %s26
      %p28 = scmp.eq.s32.totalorder %s27, 0
      %s30 = sadd.s32 %s29, 1
      %s31 = scalar_select %p28, %s29, %s30
      %p34 = pneg %p28
      %p35 = scmp.eq.s32.totalorder %s19, 1
      %p36 = por %p34, %p35
      %p37 = scmp.ne.s32.totalorder %s29, %s32
      %p38 = scmp.eq.s32.totalorder %s19, 0
      %p39 = por %p37, %p38
      %p40 = scmp.ne.s32.totalorder %s29, %s32
      %p41 = scmp.eq.s32.totalorder %s24, 1
      %p42 = por %p40, %p41
      %p43 = scmp.ne.s32.totalorder %s32, %s33
      %p44 = scmp.eq.s32.totalorder %s24, 0
      %p45 = por %p43, %p44
      %p46 = scmp.ne.s32.totalorder %s32, %s33
      %p47 = scmp.eq.s32.totalorder %s25, 1
      %p48 = por %p46, %p47
      %p50 = scmp.ne.s32.totalorder %s33, %s49
      %p51 = scmp.eq.s32.totalorder %s25, 0
      %p52 = por %p50, %p51
      %s54 = sadd.s32 %s53, 1
      %p57 = scmp.eq.s32.totalorder %s19, 1
      %p58 = scmp.ne.s32.totalorder %s53, %s55
      %p59 = scmp.eq.s32.totalorder %s19, 0
      %p60 = por %p58, %p59
      %p61 = scmp.ne.s32.totalorder %s53, %s55
      %p62 = scmp.eq.s32.totalorder %s24, 1
      %p63 = por %p61, %p62
      %p64 = scmp.ne.s32.totalorder %s55, %s56
      %p65 = scmp.eq.s32.totalorder %s24, 0
      %p66 = por %p64, %p65
      %p67 = scmp.ne.s32.totalorder %s55, %s56
      %p68 = scmp.eq.s32.totalorder %s25, 1
      %p69 = por %p67, %p68
      %p71 = scmp.ne.s32.totalorder %s56, %s70
      %p72 = scmp.eq.s32.totalorder %s25, 0
      %p73 = por %p71, %p72
      %s75 = sadd.s32 %s74, 1
      %p78 = scmp.eq.s32.totalorder %s19, 1
      %p79 = scmp.ne.s32.totalorder %s74, %s76
      %p80 = scmp.eq.s32.totalorder %s19, 0
      %p81 = por %p79, %p80
      %p82 = scmp.ne.s32.totalorder %s74, %s76
      %p83 = scmp.eq.s32.totalorder %s24, 1
      %p84 = por %p82, %p83
      %p85 = scmp.ne.s32.totalorder %s76, %s77
      %p86 = scmp.eq.s32.totalorder %s24, 0
      %p87 = por %p85, %p86
      %p88 = scmp.ne.s32.totalorder %s76, %s77
      %p89 = scmp.eq.s32.totalorder %s25, 1
      %p90 = por %p88, %p89
      %p92 = scmp.ne.s32.totalorder %s77, %s91
      %p93 = scmp.eq.s32.totalorder %s25, 0
      %p94 = por %p92, %p93
      %s96 = sadd.s32 %s95, 1
      %p99 = scmp.eq.s32.totalorder %s19, 1
      %p100 = scmp.ne.s32.totalorder %s95, %s97
      %p101 = scmp.eq.s32.totalorder %s19, 0
      %p102 = por %p100, %p101
      %p103 = scmp.ne.s32.totalorder %s95, %s97
      %p104 = scmp.eq.s32.totalorder %s24, 1
      %p105 = por %p103, %p104
      %p106 = scmp.ne.s32.totalorder %s97, %s98
      %p107 = scmp.eq.s32.totalorder %s24, 0
      %p108 = por %p106, %p107
      %p109 = scmp.ne.s32.totalorder %s97, %s98
      %p110 = scmp.eq.s32.totalorder %s25, 1
      %p111 = por %p109, %p110
      %p113 = scmp.ne.s32.totalorder %s98, %s112
      %p114 = scmp.eq.s32.totalorder %s25, 0
      %p115 = por %p113, %p114
      %s117 = sadd.s32 %s116, 1
      %p120 = scmp.eq.s32.totalorder %s19, 1
      %p121 = scmp.ne.s32.totalorder %s116, %s118
      %p122 = scmp.eq.s32.totalorder %s19, 0
      %p123 = por %p121, %p122
      %p124 = scmp.ne.s32.totalorder %s116, %s118
      %p125 = scmp.eq.s32.totalorder %s24, 1
      %p126 = por %p124, %p125
      %p127 = scmp.ne.s32.totalorder %s118, %s119
      %p128 = scmp.eq.s32.totalorder %s24, 0
      %p129 = por %p127, %p128
      %p130 = scmp.ne.s32.totalorder %s118, %s119
      %p131 = scmp.eq.s32.totalorder %s25, 1
      %p132 = por %p130, %p131
      %p134 = scmp.ne.s32.totalorder %s119, %s133
      %p135 = scmp.eq.s32.totalorder %s25, 0
      %p136 = por %p134, %p135
      %s138 = sadd.s32 %s137, 1
      %p141 = scmp.eq.s32.totalorder %s19, 1
      %p142 = scmp.ne.s32.totalorder %s137, %s139
      %p143 = scmp.eq.s32.totalorder %s19, 0
      %p144 = por %p142, %p143
      %p145 = scmp.ne.s32.totalorder %s137, %s139
      %p146 = scmp.eq.s32.totalorder %s24, 1
      %p147 = por %p145, %p146
      %p148 = scmp.ne.s32.totalorder %s139, %s140
      %p149 = scmp.eq.s32.totalorder %s24, 0
      %p150 = por %p148, %p149
      %p151 = scmp.ne.s32.totalorder %s139, %s140
      %p152 = scmp.eq.s32.totalorder %s25, 1
      %p153 = por %p151, %p152
      %p155 = scmp.ne.s32.totalorder %s140, %s154
      %p156 = scmp.eq.s32.totalorder %s25, 0
      %p157 = por %p155, %p156
      %s159 = sadd.s32 %s158, 1
      %p162 = scmp.eq.s32.totalorder %s19, 1
      %p163 = scmp.ne.s32.totalorder %s158, %s160
      %p164 = scmp.eq.s32.totalorder %s19, 0
      %p165 = por %p163, %p164
      %p166 = scmp.ne.s32.totalorder %s158, %s160
      %p167 = scmp.eq.s32.totalorder %s24, 1
      %p168 = por %p166, %p167
      %p169 = scmp.ne.s32.totalorder %s160, %s161
      %p170 = scmp.eq.s32.totalorder %s24, 0
      %p171 = por %p169, %p170
      %p172 = scmp.ne.s32.totalorder %s160, %s161
      %p173 = scmp.eq.s32.totalorder %s25, 1
      %p174 = por %p172, %p173
      %p176 = scmp.ne.s32.totalorder %s161, %s175
      %p177 = scmp.eq.s32.totalorder %s25, 0
      %p178 = por %p176, %p177
      %s180 = sadd.s32 %s179, 1
      %p183 = scmp.eq.s32.totalorder %s19, 1
      %p184 = scmp.ne.s32.totalorder %s179, %s181
      %p185 = scmp.eq.s32.totalorder %s19, 0
      %p186 = por %p184, %p185
      %p187 = scmp.ne.s32.totalorder %s179, %s181
      %p188 = scmp.eq.s32.totalorder %s24, 1
      %p189 = por %p187, %p188
      %p190 = scmp.ne.s32.totalorder %s181, %s182
      %p191 = scmp.eq.s32.totalorder %s24, 0
      %p192 = por %p190, %p191
      %p193 = scmp.ne.s32.totalorder %s181, %s182
      %p194 = scmp.eq.s32.totalorder %s25, 1
      %p195 = por %p193, %p194
      %p197 = scmp.ne.s32.totalorder %s182, %s196
      %p198 = scmp.eq.s32.totalorder %s25, 0
      %p199 = por %p197, %p198
      %s201 = sadd.s32 %s200, 1
      %p204 = scmp.eq.s32.totalorder %s19, 1
      %p205 = scmp.ne.s32.totalorder %s200, %s202
      %p206 = scmp.eq.s32.totalorder %s19, 0
      %p207 = por %p205, %p206
      %p208 = scmp.ne.s32.totalorder %s200, %s202
      %p209 = scmp.eq.s32.totalorder %s24, 1
      %p210 = por %p208, %p209
      %p211 = scmp.ne.s32.totalorder %s202, %s203
      %p212 = scmp.eq.s32.totalorder %s24, 0
      %p213 = por %p211, %p212
      %p214 = scmp.ne.s32.totalorder %s202, %s203
      %p215 = scmp.eq.s32.totalorder %s25, 1
      %p216 = por %p214, %p215
      %p218 = scmp.ne.s32.totalorder %s203, %s217
      %p219 = scmp.eq.s32.totalorder %s25, 0
      %p220 = por %p218, %p219
      %s222 = sadd.s32 %s221, 1
      %p225 = scmp.eq.s32.totalorder %s19, 1
      %p226 = scmp.ne.s32.totalorder %s221, %s223
      %p227 = scmp.eq.s32.totalorder %s19, 0
      %p228 = por %p226, %p227
      %p229 = scmp.ne.s32.totalorder %s221, %s223
      %p230 = scmp.eq.s32.totalorder %s24, 1
      %p231 = por %p229, %p230
      %p232 = scmp.ne.s32.totalorder %s223, %s224
      %p233 = scmp.eq.s32.totalorder %s24, 0
      %p234 = por %p232, %p233
      %p235 = scmp.ne.s32.totalorder %s223, %s224
      %p236 = scmp.eq.s32.totalorder %s25, 1
      %p237 = por %p235, %p236
      %p239 = scmp.ne.s32.totalorder %s224, %s238
      %p240 = scmp.eq.s32.totalorder %s25, 0
      %p241 = por %p239, %p240
      %s242 = ssub.s32 %s19, %s26
      %p243 = scmp.eq.s32.totalorder %s242, 0
      %s245 = sadd.s32 %s244, 1
      %s246 = scalar_select %p243, %s244, %s245
      %p249 = pneg %p243
      %p250 = scmp.eq.s32.totalorder %s19, 1
      %p251 = por %p249, %p250
      %p252 = scmp.ne.s32.totalorder %s244, %s247
      %p253 = scmp.eq.s32.totalorder %s19, 0
      %p254 = por %p252, %p253
      %p255 = scmp.ne.s32.totalorder %s244, %s247
      %p256 = scmp.eq.s32.totalorder %s24, 1
      %p257 = por %p255, %p256
      %p258 = scmp.ne.s32.totalorder %s247, %s248
      %p259 = scmp.eq.s32.totalorder %s24, 0
      %p260 = por %p258, %p259
      %p261 = scmp.ne.s32.totalorder %s247, %s248
      %p262 = scmp.eq.s32.totalorder %s25, 1
      %p263 = por %p261, %p262
      %p265 = scmp.ne.s32.totalorder %s248, %s264
      %p266 = scmp.eq.s32.totalorder %s25, 0
      %p267 = por %p265, %p266
      %p268 = scmp.le.s32.totalorder 1, %s19
      %p269 = scmp.lt.s32.totalorder %s19, 3
      %p270 = pnand %p268, %p269
      %p271 = pneg %p270
      // Predicated region
      $region9: #{tpu_custom_call.1} parent=5 // pred_check
        _
      $region10: #{tpu_custom_call.1} parent=5 // pred_check_branch
        %273 = sbr.rel (%p270) target = $region12
      $region11: #{tpu_custom_call.1} parent=5 // pred_region
        %s274 = ssub.s32 %s19, 1
        // Predicated region
        $region13: #{tpu_custom_call.1} parent=11 // pred_check
          %p275 = pneg %p66
        $region14: #{tpu_custom_call.1} parent=11 // pred_check_branch
          %277 = sbr.rel (%p275) target = $region16
        $region15: #{tpu_custom_call.1} parent=11 // pred_region
          _
        $region16: #{tpu_custom_call.1} parent=11 // pred_fallthru
          _
        // Predicated region
        $region17: #{tpu_custom_call.1} parent=11 // pred_check
          %p278 = pneg %p87
        $region18: #{tpu_custom_call.1} parent=11 // pred_check_branch
          %280 = sbr.rel (%p278) target = $region20
        $region19: #{tpu_custom_call.1} parent=11 // pred_region
          _
        $region20: #{tpu_custom_call.1} parent=11 // pred_fallthru
          _
        // Predicated region
        $region21: #{tpu_custom_call.1} parent=11 // pred_check
          %p281 = pneg %p108
        $region22: #{tpu_custom_call.1} parent=11 // pred_check_branch
          %283 = sbr.rel (%p281) target = $region24
        $region23: #{tpu_custom_call.1} parent=11 // pred_region
          _
        $region24: #{tpu_custom_call.1} parent=11 // pred_fallthru
          _
        // Predicated region
        $region25: #{tpu_custom_call.1} parent=11 // pred_check
          %p284 = pneg %p129
        $region26: #{tpu_custom_call.1} parent=11 // pred_check_branch
          %286 = sbr.rel (%p284) target = $region28
        $region27: #{tpu_custom_call.1} parent=11 // pred_region
          _
        $region28: #{tpu_custom_call.1} parent=11 // pred_fallthru
          _
        // Predicated region
        $region29: #{tpu_custom_call.1} parent=11 // pred_check
          %p287 = pneg %p150
        $region30: #{tpu_custom_call.1} parent=11 // pred_check_branch
          %289 = sbr.rel (%p287) target = $region32
        $region31: #{tpu_custom_call.1} parent=11 // pred_region
          _
        $region32: #{tpu_custom_call.1} parent=11 // pred_fallthru
          _
        // Predicated region
        $region33: #{tpu_custom_call.1} parent=11 // pred_check
          %p290 = pneg %p171
        $region34: #{tpu_custom_call.1} parent=11 // pred_check_branch
          %292 = sbr.rel (%p290) target = $region36
        $region35: #{tpu_custom_call.1} parent=11 // pred_region
          _
        $region36: #{tpu_custom_call.1} parent=11 // pred_fallthru
          _
        // Predicated region
        $region37: #{tpu_custom_call.1} parent=11 // pred_check
          %p293 = pneg %p192
        $region38: #{tpu_custom_call.1} parent=11 // pred_check_branch
          %295 = sbr.rel (%p293) target = $region40
        $region39: #{tpu_custom_call.1} parent=11 // pred_region
          _
        $region40: #{tpu_custom_call.1} parent=11 // pred_fallthru
          _
        // Predicated region
        $region41: #{tpu_custom_call.1} parent=11 // pred_check
          %p296 = pneg %p213
        $region42: #{tpu_custom_call.1} parent=11 // pred_check_branch
          %298 = sbr.rel (%p296) target = $region44
        $region43: #{tpu_custom_call.1} parent=11 // pred_region
          _
        $region44: #{tpu_custom_call.1} parent=11 // pred_fallthru
          _
        // Predicated region
        $region45: #{tpu_custom_call.1} parent=11 // pred_check
          %p299 = pneg %p234
        $region46: #{tpu_custom_call.1} parent=11 // pred_check_branch
          %301 = sbr.rel (%p299) target = $region48
        $region47: #{tpu_custom_call.1} parent=11 // pred_region
          _
        $region48: #{tpu_custom_call.1} parent=11 // pred_fallthru
          _
      $region12: #{tpu_custom_call.1} parent=5 // pred_fallthru
        _
      %p302 = scmp.lt.s32.totalorder %s19, 2
      // Predicated region
      $region49: #{tpu_custom_call.1} parent=5 // pred_check
        %p303 = pneg %p302
      $region50: #{tpu_custom_call.1} parent=5 // pred_check_branch
        %305 = sbr.rel (%p303) target = $region52
      $region51: #{tpu_custom_call.1} parent=5 // pred_region
        // Predicated region
        $region53: #{tpu_custom_call.1} parent=51 // pred_check
          %p306 = pneg %p39
        $region54: #{tpu_custom_call.1} parent=51 // pred_check_branch
          %308 = sbr.rel (%p306) target = $region56
        $region55: #{tpu_custom_call.1} parent=51 // pred_region
          %p309 = scmp.lt.s32.totalorder %s19, 1
          %s310 = scalar_select %p309, %s19, 1
          %s311 = smul.addr %s310, 4
          %s312 = smul.addr %s311, 8
          %s313 = scalar_lea.vmem %s0, %s312
        $region56: #{tpu_custom_call.1} parent=51 // pred_fallthru
          _
      $region52: #{tpu_custom_call.1} parent=5 // pred_fallthru
        _
      %p314 = scmp.le.s32.totalorder 1, %s19
      %p315 = scmp.lt.s32.totalorder %s19, 3
      %p316 = pnand %p314, %p315
      %p317 = pneg %p316
      // Predicated region
      $region57: #{tpu_custom_call.1} parent=5 // pred_check
        _
      $region58: #{tpu_custom_call.1} parent=5 // pred_check_branch
        %319 = sbr.rel (%p316) target = $region60
      $region59: #{tpu_custom_call.1} parent=5 // pred_region
        %s320 = ssub.s32 %s19, 1
        %p321 = scmp.lt.s32.totalorder %s24, 1
        %s322 = scalar_select %p321, %s24, 1
        %s323 = smul.addr %s322, 4
        %s324 = smul.addr %s323, 8
        %s325 = scalar_lea.vmem %s0, %s324
        %p326 = pneg %p45
        %p327 = pneg %p42
        %p328 = pneg %p66
        %p329 = pneg %p63
        %p330 = pneg %p87
        %p331 = pneg %p84
        %p332 = pneg %p108
        %p333 = pneg %p105
        %p334 = pneg %p129
        %p335 = pneg %p126
        %p336 = pneg %p150
        %p337 = pneg %p147
        %p338 = pneg %p171
        %p339 = pneg %p168
        %p340 = pneg %p192
        %p341 = pneg %p189
        %p342 = pneg %p213
        %p343 = pneg %p210
        %p344 = pneg %p234
        %p345 = pneg %p231
        %p346 = pneg %p260
        %p347 = pneg %p257
        %s348 = sand.u32 %s247, 1
        %s349 = scalar_lea.sflag [#allocation4], %s348
        %s350 = sand.u32 %s247, 1
        %s351 = smul.addr %s350, 32
        %s352 = scalar_lea.vmem [#allocation3], %s351
        %p353 = scmp.lt.s32.totalorder %s24, 1
        %s354 = scalar_select %p353, %s24, 1
        %s355 = smul.addr %s354, 4
        %s356 = smul.addr %s355, 8
        %s357 = scalar_lea.vmem %s0, %s356
        %v358 = vld [vmem:[%s357] sm:$0xff]
        %v359 = vld [vmem:[%s357 + $0x8] sm:$0xff]
        %v360 = vld [vmem:[%s357 + $0x10] sm:$0xff]
        %v361 = vld [vmem:[%s357 + $0x18] sm:$0xff]
        %362 = vst [vmem:[#allocation2] sm:$0xff] 0.0
        %363 = vst [vmem:[#allocation2 + $0x8] sm:$0xff] 0.0
        %vm364 = vcmask 277504
        %365 = vst.msk [vmem:[#allocation2 + $0x10] sm:$0xff] %vm364, 0.0
        %366 = vst [vmem:[#allocation2 + $0x18] sm:$0xff] 0.0
        %367 = vst [vmem:[#allocation2 + $0x20] sm:$0xff] 0.0
        %368 = vst.msk [vmem:[#allocation2 + $0x28] sm:$0xff] %vm364, 0.0
        %373 = vrot.lane.b32.xlu0 %v358, 17
        %v374 = vpop.permute.xlu0 %373
        %375 = vrot.lane.b32.xlu0 %v359, 17
        %v376 = vpop.permute.xlu0 %375
        %377 = vrot.lane.b32.xlu0 %v360, 17
        %v378 = vpop.permute.xlu0 %377
        %379 = vrot.lane.b32.xlu0 %v361, 17
        %v380 = vpop.permute.xlu0 %379
        %vm381 = vcmask 138240
        %v382 = vsel %vm381, %v374, %v376
        %v383 = vsel %vm381, %v378, %v380
        %vm390 = vcmask 1047688
        %391 = vst.msk [vmem:[#allocation2] sm:$0xff] %vm390, %v374
        %392 = vst [vmem:[#allocation2 + $0x8] sm:$0xff] %v382
        %393 = vst.msk [vmem:[#allocation2 + $0x10] sm:$0xff] %vm381, %v376
        %394 = vst.msk [vmem:[#allocation2 + $0x18] sm:$0xff] %vm390, %v378
        %395 = vst [vmem:[#allocation2 + $0x20] sm:$0xff] %v383
        %396 = vst.msk [vmem:[#allocation2 + $0x28] sm:$0xff] %vm381, %v380
        %v397 = vld [vmem:[%s4] sm:$0x3]
        %v398 = vld [vmem:[%s5] sm:$0x3]
        %v399 = vld [vmem:[%s2] sm:$0xff]
        %v400 = vld [vmem:[%s2 + $0x8] sm:$0xff]
        %402 = vset.pattern.permute.xlu0 0
        %403 = vperm.xlu0 %402, %v399
        %v404 = vpop.permute.xlu0 %403
        %407 = vset.pattern.permute.xlu0 0
        %408 = vperm.xlu0 %407, %v400
        %v409 = vpop.permute.xlu0 %408
        %v411 = vmul.f32 %v358, %v404
        %v412 = vmul.f32 %v359, %v404
        %v413 = vmul.f32 %v360, %v409
        %v414 = vmul.f32 %v361, %v409
        %v415 = vld [vmem:[%s3] sm:$0xff]
        %v416 = vld [vmem:[%s3 + $0x8] sm:$0xff]
        %418 = vset.pattern.permute.xlu0 0
        %419 = vperm.xlu0 %418, %v415
        %v420 = vpop.permute.xlu0 %419
        %423 = vset.pattern.permute.xlu0 0
        %424 = vperm.xlu0 %423, %v416
        %v425 = vpop.permute.xlu0 %424
        %v427 = vadd.f32 %v411, %v420
        %v428 = vadd.f32 %v412, %v420
        %v429 = vadd.f32 %v413, %v425
        %v430 = vadd.f32 %v414, %v425
        %v431 = vld [vmem:[#allocation2] sm:$0xff]
        %v432 = vld [vmem:[#allocation2 + $0x8] sm:$0xff]
        %v433 = vld [vmem:[#allocation2 + $0x18] sm:$0xff]
        %v434 = vld [vmem:[#allocation2 + $0x20] sm:$0xff]
        %v436 = vperm.slane %v397, 0
        %v437 = vperm.slane %v397, 1
        %v440 = vmul.f32 %v431, %v436
        %v441 = vmul.f32 %v432, %v437
        %v442 = vmul.f32 %v433, %v436
        %v443 = vmul.f32 %v434, %v437
        %v444 = vld [vmem:[%s1] sm:$0xff]
        %v445 = vld [vmem:[%s1 + $0x8] sm:$0xff]
        %447 = vset.pattern.permute.xlu0 0
        %448 = vperm.xlu0 %447, %v444
        %v449 = vpop.permute.xlu0 %448
        %452 = vset.pattern.permute.xlu0 0
        %453 = vperm.xlu0 %452, %v445
        %v454 = vpop.permute.xlu0 %453
        %v456 = vmul.f32 %v440, %v449
        %v457 = vmul.f32 %v441, %v449
        %v458 = vmul.f32 %v442, %v454
        %v459 = vmul.f32 %v443, %v454
        %v460 = vadd.f32 %v427, %v456
        %v461 = vadd.f32 %v428, %v457
        %v462 = vadd.f32 %v429, %v458
        %v463 = vadd.f32 %v430, %v459
        %v464 = vld [vmem:[#allocation2] sm:$0xff]
        %v465 = vld [vmem:[#allocation2 + $0x8] sm:$0xff]
        %v466 = vld [vmem:[#allocation2 + $0x10] sm:$0xff]
        %v467 = vld [vmem:[#allocation2 + $0x18] sm:$0xff]
        %v468 = vld [vmem:[#allocation2 + $0x20] sm:$0xff]
        %v469 = vld [vmem:[#allocation2 + $0x28] sm:$0xff]
        %470 = vset.pattern.permute.xlu0 1
        %471 = vperm.xlu0 %470, %v444
        %v472 = vpop.permute.xlu0 %471
        %474 = vset.pattern.permute.xlu0 1
        %475 = vperm.xlu0 %474, %v445
        %v476 = vpop.permute.xlu0 %475
        %v478 = vmul.f32 %v464, %v472
        %v479 = vmul.f32 %v465, %v472
        %v480 = vmul.f32 %v466, %v472
        %v481 = vmul.f32 %v467, %v476
        %v482 = vmul.f32 %v468, %v476
        %v483 = vmul.f32 %v469, %v476
        %490 = vrot.lane.b32.xlu0 %v478, 127
        %v491 = vpop.permute.xlu0 %490
        %492 = vrot.lane.b32.xlu0 %v479, 127
        %v493 = vpop.permute.xlu0 %492
        %494 = vrot.lane.b32.xlu0 %v480, 127
        %v495 = vpop.permute.xlu0 %494
        %496 = vrot.lane.b32.xlu0 %v481, 127
        %v497 = vpop.permute.xlu0 %496
        %498 = vrot.lane.b32.xlu0 %v482, 127
        %v499 = vpop.permute.xlu0 %498
        %500 = vrot.lane.b32.xlu0 %v483, 127
        %v501 = vpop.permute.xlu0 %500
        %vm502 = vcmask 1039360
        %v503 = vsel %vm502, %v491, %v493
        %v504 = vsel %vm502, %v493, %v495
        %v505 = vsel %vm502, %v497, %v499
        %v506 = vsel %vm502, %v499, %v501
        %v511 = vadd.f32 %v460, %v503
        %v512 = vadd.f32 %v461, %v504
        %v513 = vadd.f32 %v462, %v505
        %v514 = vadd.f32 %v463, %v506
        %v516 = vperm.slane %v398, 0
        %v517 = vperm.slane %v398, 1
        %518 = vrot.lane.b32.xlu0 %v516, 2
        %v519 = vpop.permute.xlu0 %518
        %520 = vrot.lane.b32.xlu0 %v517, 2
        %v521 = vpop.permute.xlu0 %520
        %vm522 = vcmask 15360
        %v523 = vsel %vm522, %v519, %v521
        %v527 = vmul.f32 %v464, %v519
        %v528 = vmul.f32 %v465, %v523
        %v529 = vmul.f32 %v466, %v521
        %v530 = vmul.f32 %v467, %v519
        %v531 = vmul.f32 %v468, %v523
        %v532 = vmul.f32 %v469, %v521
        %533 = vset.pattern.permute.xlu0 2
        %534 = vperm.xlu0 %533, %v444
        %v535 = vpop.permute.xlu0 %534
        %537 = vset.pattern.permute.xlu0 2
        %538 = vperm.xlu0 %537, %v445
        %v539 = vpop.permute.xlu0 %538
        %v541 = vmul.f32 %v527, %v535
        %v542 = vmul.f32 %v528, %v535
        %v543 = vmul.f32 %v529, %v535
        %v544 = vmul.f32 %v530, %v539
        %v545 = vmul.f32 %v531, %v539
        %v546 = vmul.f32 %v532, %v539
        %553 = vrot.lane.b32.xlu0 %v541, 126
        %v554 = vpop.permute.xlu0 %553
        %555 = vrot.lane.b32.xlu0 %v542, 126
        %v556 = vpop.permute.xlu0 %555
        %557 = vrot.lane.b32.xlu0 %v543, 126
        %v558 = vpop.permute.xlu0 %557
        %559 = vrot.lane.b32.xlu0 %v544, 126
        %v560 = vpop.permute.xlu0 %559
        %561 = vrot.lane.b32.xlu0 %v545, 126
        %v562 = vpop.permute.xlu0 %561
        %563 = vrot.lane.b32.xlu0 %v546, 126
        %v564 = vpop.permute.xlu0 %563
        %vm565 = vcmask 1031168
        %v566 = vsel %vm565, %v554, %v556
        %v567 = vsel %vm565, %v556, %v558
        %v568 = vsel %vm565, %v560, %v562
        %v569 = vsel %vm565, %v562, %v564
        %v574 = vadd.f32 %v511, %v566
        %v575 = vadd.f32 %v512, %v567
        %v576 = vadd.f32 %v513, %v568
        %v577 = vadd.f32 %v514, %v569
        %578 = vrot.lane.b32.xlu0 %v436, 16
        %v579 = vpop.permute.xlu0 %578
        %580 = vrot.lane.b32.xlu0 %v437, 16
        %v581 = vpop.permute.xlu0 %580
        %vm582 = vcmask 130048
        %v583 = vsel %vm582, %v579, %v581
        %v587 = vmul.f32 %v464, %v579
        %v588 = vmul.f32 %v465, %v583
        %v589 = vmul.f32 %v466, %v581
        %v590 = vmul.f32 %v467, %v579
        %v591 = vmul.f32 %v468, %v583
        %v592 = vmul.f32 %v469, %v581
        %593 = vset.pattern.permute.xlu0 3
        %594 = vperm.xlu0 %593, %v444
        %v595 = vpop.permute.xlu0 %594
        %597 = vset.pattern.permute.xlu0 3
        %598 = vperm.xlu0 %597, %v445
        %v599 = vpop.permute.xlu0 %598
        %v601 = vmul.f32 %v587, %v595
        %v602 = vmul.f32 %v588, %v595
        %v603 = vmul.f32 %v589, %v595
        %v604 = vmul.f32 %v590, %v599
        %v605 = vmul.f32 %v591, %v599
        %v606 = vmul.f32 %v592, %v599
        %613 = vrot.lane.b32.xlu0 %v601, 112
        %v614 = vpop.permute.xlu0 %613
        %615 = vrot.lane.b32.xlu0 %v602, 112
        %v616 = vpop.permute.xlu0 %615
        %617 = vrot.lane.b32.xlu0 %v603, 112
        %v618 = vpop.permute.xlu0 %617
        %619 = vrot.lane.b32.xlu0 %v604, 112
        %v620 = vpop.permute.xlu0 %619
        %621 = vrot.lane.b32.xlu0 %v605, 112
        %v622 = vpop.permute.xlu0 %621
        %623 = vrot.lane.b32.xlu0 %v606, 112
        %v624 = vpop.permute.xlu0 %623
        %vm625 = vcmask 916480
        %v626 = vsel %vm625, %v614, %v616
        %v627 = vsel %vm625, %v616, %v618
        %v628 = vsel %vm625, %v620, %v622
        %v629 = vsel %vm625, %v622, %v624
        %v634 = vadd.f32 %v574, %v626
        %v635 = vadd.f32 %v575, %v627
        %v636 = vadd.f32 %v576, %v628
        %v637 = vadd.f32 %v577, %v629
        %638 = vset.pattern.permute.xlu0 4
        %639 = vperm.xlu0 %638, %v444
        %v640 = vpop.permute.xlu0 %639
        %642 = vset.pattern.permute.xlu0 4
        %643 = vperm.xlu0 %642, %v445
        %v644 = vpop.permute.xlu0 %643
        %v646 = vmul.f32 %v464, %v640
        %v647 = vmul.f32 %v465, %v640
        %v648 = vmul.f32 %v466, %v640
        %v649 = vmul.f32 %v467, %v644
        %v650 = vmul.f32 %v468, %v644
        %v651 = vmul.f32 %v469, %v644
        %658 = vrot.lane.b32.xlu0 %v646, 111
        %v659 = vpop.permute.xlu0 %658
        %660 = vrot.lane.b32.xlu0 %v647, 111
        %v661 = vpop.permute.xlu0 %660
        %662 = vrot.lane.b32.xlu0 %v648, 111
        %v663 = vpop.permute.xlu0 %662
        %664 = vrot.lane.b32.xlu0 %v649, 111
        %v665 = vpop.permute.xlu0 %664
        %666 = vrot.lane.b32.xlu0 %v650, 111
        %v667 = vpop.permute.xlu0 %666
        %668 = vrot.lane.b32.xlu0 %v651, 111
        %v669 = vpop.permute.xlu0 %668
        %vm670 = vcmask 908288
        %v671 = vsel %vm670, %v659, %v661
        %v672 = vsel %vm670, %v661, %v663
        %v673 = vsel %vm670, %v665, %v667
        %v674 = vsel %vm670, %v667, %v669
        %v679 = vadd.f32 %v634, %v671
        %v680 = vadd.f32 %v635, %v672
        %v681 = vadd.f32 %v636, %v673
        %v682 = vadd.f32 %v637, %v674
        %683 = vrot.lane.b32.xlu0 %v516, 18
        %v684 = vpop.permute.xlu0 %683
        %685 = vrot.lane.b32.xlu0 %v517, 18
        %v686 = vpop.permute.xlu0 %685
        %vm687 = vcmask 146432
        %v688 = vsel %vm687, %v684, %v686
        %v692 = vmul.f32 %v464, %v684
        %v693 = vmul.f32 %v465, %v688
        %v694 = vmul.f32 %v466, %v686
        %v695 = vmul.f32 %v467, %v684
        %v696 = vmul.f32 %v468, %v688
        %v697 = vmul.f32 %v469, %v686
        %698 = vset.pattern.permute.xlu0 5
        %699 = vperm.xlu0 %698, %v444
        %v700 = vpop.permute.xlu0 %699
        %702 = vset.pattern.permute.xlu0 5
        %703 = vperm.xlu0 %702, %v445
        %v704 = vpop.permute.xlu0 %703
        %v706 = vmul.f32 %v692, %v700
        %v707 = vmul.f32 %v693, %v700
        %v708 = vmul.f32 %v694, %v700
        %v709 = vmul.f32 %v695, %v704
        %v710 = vmul.f32 %v696, %v704
        %v711 = vmul.f32 %v697, %v704
        %718 = vrot.lane.b32.xlu0 %v706, 110
        %v719 = vpop.permute.xlu0 %718
        %720 = vrot.lane.b32.xlu0 %v707, 110
        %v721 = vpop.permute.xlu0 %720
        %722 = vrot.lane.b32.xlu0 %v708, 110
        %v723 = vpop.permute.xlu0 %722
        %724 = vrot.lane.b32.xlu0 %v709, 110
        %v725 = vpop.permute.xlu0 %724
        %726 = vrot.lane.b32.xlu0 %v710, 110
        %v727 = vpop.permute.xlu0 %726
        %728 = vrot.lane.b32.xlu0 %v711, 110
        %v729 = vpop.permute.xlu0 %728
        %vm730 = vcmask 900096
        %v731 = vsel %vm730, %v719, %v721
        %v732 = vsel %vm730, %v721, %v723
        %v733 = vsel %vm730, %v725, %v727
        %v734 = vsel %vm730, %v727, %v729
        %v739 = vadd.f32 %v679, %v731
        %v740 = vadd.f32 %v680, %v732
        %v741 = vadd.f32 %v681, %v733
        %v742 = vadd.f32 %v682, %v734
        %743 = vrot.lane.b32.xlu0 %v436, 32
        %v744 = vpop.permute.xlu0 %743
        %745 = vrot.lane.b32.xlu0 %v437, 32
        %v746 = vpop.permute.xlu0 %745
        %vm747 = vcmask 261120
        %v748 = vsel %vm747, %v744, %v746
        %v752 = vmul.f32 %v464, %v744
        %v753 = vmul.f32 %v465, %v748
        %v754 = vmul.f32 %v466, %v746
        %v755 = vmul.f32 %v467, %v744
        %v756 = vmul.f32 %v468, %v748
        %v757 = vmul.f32 %v469, %v746
        %758 = vset.pattern.permute.xlu0 6
        %759 = vperm.xlu0 %758, %v444
        %v760 = vpop.permute.xlu0 %759
        %762 = vset.pattern.permute.xlu0 6
        %763 = vperm.xlu0 %762, %v445
        %v764 = vpop.permute.xlu0 %763
        %v766 = vmul.f32 %v752, %v760
        %v767 = vmul.f32 %v753, %v760
        %v768 = vmul.f32 %v754, %v760
        %v769 = vmul.f32 %v755, %v764
        %v770 = vmul.f32 %v756, %v764
        %v771 = vmul.f32 %v757, %v764
        %778 = vrot.lane.b32.xlu0 %v766, 96
        %v779 = vpop.permute.xlu0 %778
        %780 = vrot.lane.b32.xlu0 %v767, 96
        %v781 = vpop.permute.xlu0 %780
        %782 = vrot.lane.b32.xlu0 %v768, 96
        %v783 = vpop.permute.xlu0 %782
        %784 = vrot.lane.b32.xlu0 %v769, 96
        %v785 = vpop.permute.xlu0 %784
        %786 = vrot.lane.b32.xlu0 %v770, 96
        %v787 = vpop.permute.xlu0 %786
        %788 = vrot.lane.b32.xlu0 %v771, 96
        %v789 = vpop.permute.xlu0 %788
        %vm790 = vcmask 785408
        %v791 = vsel %vm790, %v779, %v781
        %v792 = vsel %vm790, %v781, %v783
        %v793 = vsel %vm790, %v785, %v787
        %v794 = vsel %vm790, %v787, %v789
        %v799 = vadd.f32 %v739, %v791
        %v800 = vadd.f32 %v740, %v792
        %v801 = vadd.f32 %v741, %v793
        %v802 = vadd.f32 %v742, %v794
        %803 = vset.pattern.permute.xlu0 7
        %804 = vperm.xlu0 %803, %v444
        %v805 = vpop.permute.xlu0 %804
        %807 = vset.pattern.permute.xlu0 7
        %808 = vperm.xlu0 %807, %v445
        %v809 = vpop.permute.xlu0 %808
        %v811 = vmul.f32 %v464, %v805
        %v812 = vmul.f32 %v465, %v805
        %v813 = vmul.f32 %v466, %v805
        %v814 = vmul.f32 %v467, %v809
        %v815 = vmul.f32 %v468, %v809
        %v816 = vmul.f32 %v469, %v809
        %823 = vrot.lane.b32.xlu0 %v811, 95
        %v824 = vpop.permute.xlu0 %823
        %825 = vrot.lane.b32.xlu0 %v812, 95
        %v826 = vpop.permute.xlu0 %825
        %827 = vrot.lane.b32.xlu0 %v813, 95
        %v828 = vpop.permute.xlu0 %827
        %829 = vrot.lane.b32.xlu0 %v814, 95
        %v830 = vpop.permute.xlu0 %829
        %831 = vrot.lane.b32.xlu0 %v815, 95
        %v832 = vpop.permute.xlu0 %831
        %833 = vrot.lane.b32.xlu0 %v816, 95
        %v834 = vpop.permute.xlu0 %833
        %vm835 = vcmask 777216
        %v836 = vsel %vm835, %v824, %v826
        %v837 = vsel %vm835, %v826, %v828
        %v838 = vsel %vm835, %v830, %v832
        %v839 = vsel %vm835, %v832, %v834
        %v844 = vadd.f32 %v799, %v836
        %v845 = vadd.f32 %v800, %v837
        %v846 = vadd.f32 %v801, %v838
        %v847 = vadd.f32 %v802, %v839
        %848 = vrot.lane.b32.xlu0 %v516, 34
        %v849 = vpop.permute.xlu0 %848
        %850 = vrot.lane.b32.xlu0 %v517, 34
        %v851 = vpop.permute.xlu0 %850
        %v852 = vsel %vm364, %v849, %v851
        %v856 = vmul.f32 %v464, %v849
        %v857 = vmul.f32 %v465, %v852
        %v858 = vmul.f32 %v466, %v851
        %v859 = vmul.f32 %v467, %v849
        %v860 = vmul.f32 %v468, %v852
        %v861 = vmul.f32 %v469, %v851
        %862 = vset.pattern.permute.xlu0 8
        %863 = vperm.xlu0 %862, %v444
        %v864 = vpop.permute.xlu0 %863
        %866 = vset.pattern.permute.xlu0 8
        %867 = vperm.xlu0 %866, %v445
        %v868 = vpop.permute.xlu0 %867
        %v870 = vmul.f32 %v856, %v864
        %v871 = vmul.f32 %v857, %v864
        %v872 = vmul.f32 %v858, %v864
        %v873 = vmul.f32 %v859, %v868
        %v874 = vmul.f32 %v860, %v868
        %v875 = vmul.f32 %v861, %v868
        %882 = vrot.lane.b32.xlu0 %v870, 94
        %v883 = vpop.permute.xlu0 %882
        %884 = vrot.lane.b32.xlu0 %v871, 94
        %v885 = vpop.permute.xlu0 %884
        %886 = vrot.lane.b32.xlu0 %v872, 94
        %v887 = vpop.permute.xlu0 %886
        %888 = vrot.lane.b32.xlu0 %v873, 94
        %v889 = vpop.permute.xlu0 %888
        %890 = vrot.lane.b32.xlu0 %v874, 94
        %v891 = vpop.permute.xlu0 %890
        %892 = vrot.lane.b32.xlu0 %v875, 94
        %v893 = vpop.permute.xlu0 %892
        %vm894 = vcmask 769024
        %v895 = vsel %vm894, %v883, %v885
        %v896 = vsel %vm894, %v885, %v887
        %v897 = vsel %vm894, %v889, %v891
        %v898 = vsel %vm894, %v891, %v893
        %v903 = vadd.f32 %v844, %v895
        %v904 = vadd.f32 %v845, %v896
        %v905 = vadd.f32 %v846, %v897
        %v906 = vadd.f32 %v847, %v898
        %v907 = vld [vmem:[%s6] sm:$0xff]
        %v908 = vld [vmem:[%s6 + $0x8] sm:$0xff]
        %v909 = vld [vmem:[%s6 + $0x10] sm:$0xff]
        %v910 = vld [vmem:[%s6 + $0x18] sm:$0xff]
        %v911 = vld [vmem:[%s7] sm:$0xff]
        %v912 = vld [vmem:[%s7 + $0x8] sm:$0xff]
        %v913 = vld [vmem:[%s7 + $0x10] sm:$0xff]
        %v914 = vld [vmem:[%s7 + $0x18] sm:$0xff]
        %916 = vset.pattern.permute.xlu0 0
        %917 = vperm.xlu0 %916, %v911
        %v918 = vpop.permute.xlu0 %917
        %921 = vset.pattern.permute.xlu0 0
        %922 = vperm.xlu0 %921, %v912
        %v923 = vpop.permute.xlu0 %922
        %926 = vset.pattern.permute.xlu0 0
        %927 = vperm.xlu0 %926, %v913
        %v928 = vpop.permute.xlu0 %927
        %931 = vset.pattern.permute.xlu0 0
        %932 = vperm.xlu0 %931, %v914
        %v933 = vpop.permute.xlu0 %932
        %v936 = vsel %vm582, %v907, 0
        %v939 = vsel %vm582, %v908, 0
        %v942 = vsel %vm582, %v909, 0
        %v945 = vsel %vm582, %v910, 0
        %947 = vmatpush.msra.mxu0 0.0
        %948 = vmatpush.msra.mxu0 0.0
        %949 = vmatpush.msra.mxu0 0.0
        %950 = vmatpush.msra.mxu0 0.0
        %951 = vmatpush.msra.mxu0 0.0
        %952 = vmatpush.msra.mxu0 0.0
        %953 = vmatpush.msra.mxu0 0.0
        %954 = vmatpush.msra.mxu0 0.0
        %955 = vmatpush.msra.mxu0 0.0
        %956 = vmatpush.msra.mxu0 0.0
        %957 = vmatpush.msra.mxu0 0.0
        %958 = vmatpush.msra.mxu0 0.0
        %959 = vmatpush.msra.mxu0 0.0
        %960 = vmatpush.msra.mxu0 0.0
        %961 = vmatpush.msra.mxu0 %v905
        %962 = vmatpush.msra.mxu0 %v903
        %963 = vmatmul.f32.gmra.mxu0 %v936
        %v964 = vpop.f32.mrf.mxu0
        %v965 = vadd.f32 %v918, %v964
        %966 = vmatmul.f32.gmra.mxu0 %v939
        %v967 = vpop.f32.mrf.mxu0
        %v968 = vadd.f32 %v923, %v967
        %969 = vmatmul.f32.gmra.mxu0 %v942
        %v970 = vpop.f32.mrf.mxu0
        %v971 = vadd.f32 %v928, %v970
        %972 = vmatmul.f32.gmra.mxu0 %v945
        %v973 = vpop.f32.mrf.mxu0
        %v974 = vadd.f32 %v933, %v973
        %975 = vdwg.mxu0
        %976 = vmatpush.msra.mxu0 0.0
        %977 = vmatpush.msra.mxu0 0.0
        %978 = vmatpush.msra.mxu0 0.0
        %979 = vmatpush.msra.mxu0 0.0
        %980 = vmatpush.msra.mxu0 0.0
        %981 = vmatpush.msra.mxu0 0.0
        %982 = vmatpush.msra.mxu0 0.0
        %983 = vmatpush.msra.mxu0 0.0
        %984 = vmatpush.msra.mxu0 0.0
        %985 = vmatpush.msra.mxu0 0.0
        %986 = vmatpush.msra.mxu0 0.0
        %987 = vmatpush.msra.mxu0 0.0
        %988 = vmatpush.msra.mxu0 0.0
        %989 = vmatpush.msra.mxu0 0.0
        %990 = vmatpush.msra.mxu0 %v906
        %991 = vmatpush.msra.mxu0 %v904
        %992 = vmatmul.f32.gmra.mxu0 %v936
        %v993 = vpop.f32.mrf.mxu0
        %v994 = vadd.f32 %v918, %v993
        %995 = vmatmul.f32.gmra.mxu0 %v939
        %v996 = vpop.f32.mrf.mxu0
        %v997 = vadd.f32 %v923, %v996
        %998 = vmatmul.f32.gmra.mxu0 %v942
        %v999 = vpop.f32.mrf.mxu0
        %v1000 = vadd.f32 %v928, %v999
        %1001 = vmatmul.f32.gmra.mxu0 %v945
        %v1002 = vpop.f32.mrf.mxu0
        %v1003 = vadd.f32 %v933, %v1002
        %1004 = vdwg.mxu0
        %v1005 = vmul.f32 %v965, 0.5
        %v1006 = vmul.f32 %v994, 0.5
        %v1007 = vmul.f32 %v968, 0.5
        %v1008 = vmul.f32 %v997, 0.5
        %v1009 = vmul.f32 %v971, 0.5
        %v1010 = vmul.f32 %v1000, 0.5
        %v1011 = vmul.f32 %v974, 0.5
        %v1012 = vmul.f32 %v1003, 0.5
        %v1013 = vmul.f32 %v965, 0.70710677
        %v1014 = vmul.f32 %v994, 0.70710677
        %v1015 = vmul.f32 %v968, 0.70710677
        %v1016 = vmul.f32 %v997, 0.70710677
        %v1017 = vmul.f32 %v971, 0.70710677
        %v1018 = vmul.f32 %v1000, 0.70710677
        %v1019 = vmul.f32 %v974, 0.70710677
        %v1020 = vmul.f32 %v1003, 0.70710677
        %v1021 = vand.u32 2147483647, %v1013
        %v1022 = vand.u32 2147483647, %v1014
        %v1023 = vand.u32 2147483647, %v1015
        %v1024 = vand.u32 2147483647, %v1016
        %v1025 = vand.u32 2147483647, %v1017
        %v1026 = vand.u32 2147483647, %v1018
        %v1027 = vand.u32 2147483647, %v1019
        %v1028 = vand.u32 2147483647, %v1020
        %v1029 = vmul.f32 %v1021, 0.3275911
        %v1030 = vmul.f32 %v1022, 0.3275911
        %v1031 = vmul.f32 %v1023, 0.3275911
        %v1032 = vmul.f32 %v1024, 0.3275911
        %v1033 = vmul.f32 %v1025, 0.3275911
        %v1034 = vmul.f32 %v1026, 0.3275911
        %v1035 = vmul.f32 %v1027, 0.3275911
        %v1036 = vmul.f32 %v1028, 0.3275911
        %v1037 = vadd.f32 %v1029, 1.0
        %v1038 = vadd.f32 %v1030, 1.0
        %v1039 = vadd.f32 %v1031, 1.0
        %v1040 = vadd.f32 %v1032, 1.0
        %v1041 = vadd.f32 %v1033, 1.0
        %v1042 = vadd.f32 %v1034, 1.0
        %v1043 = vadd.f32 %v1035, 1.0
        %v1044 = vadd.f32 %v1036, 1.0
        %v1045 = vrcp.pop %v1037
        %v1046 = vmul.f32 %v1037, %v1045
        %v1047 = vsub.f32 1.0, %v1046
        %v1048 = vmul.f32 %v1045, %v1047
        %v1049 = vadd.f32 %v1045, %v1048
        %vm1050 = vweird.f32 %v1037
        %vm1051 = vweird.f32 %v1045
        %vm1052 = vmor %vm1050, %vm1051
        %v1053 = vsel %vm1052, %v1045, %v1049
        %v1054 = vand.u32 2147483647, %v1037
        %vm1055 = vcmp.eq.f32.partialorder %v1054, 8.507059e+37
        %v1056 = vand.u32 %v1037, 2147483648
        %v1057 = vor.u32 1.1754944e-38, %v1056
        %v1058 = vsel %vm1055, %v1057, %v1053
        %v1059 = vmul.f32 1.0, %v1058
        %v1060 = vrcp.pop %v1038
        %v1061 = vmul.f32 %v1038, %v1060
        %v1062 = vsub.f32 1.0, %v1061
        %v1063 = vmul.f32 %v1060, %v1062
        %v1064 = vadd.f32 %v1060, %v1063
        %vm1065 = vweird.f32 %v1038
        %vm1066 = vweird.f32 %v1060
        %vm1067 = vmor %vm1065, %vm1066
        %v1068 = vsel %vm1067, %v1060, %v1064
        %v1069 = vand.u32 2147483647, %v1038
        %vm1070 = vcmp.eq.f32.partialorder %v1069, 8.507059e+37
        %v1071 = vand.u32 %v1038, 2147483648
        %v1072 = vor.u32 1.1754944e-38, %v1071
        %v1073 = vsel %vm1070, %v1072, %v1068
        %v1074 = vmul.f32 1.0, %v1073
        %v1075 = vrcp.pop %v1039
        %v1076 = vmul.f32 %v1039, %v1075
        %v1077 = vsub.f32 1.0, %v1076
        %v1078 = vmul.f32 %v1075, %v1077
        %v1079 = vadd.f32 %v1075, %v1078
        %vm1080 = vweird.f32 %v1039
        %vm1081 = vweird.f32 %v1075
        %vm1082 = vmor %vm1080, %vm1081
        %v1083 = vsel %vm1082, %v1075, %v1079
        %v1084 = vand.u32 2147483647, %v1039
        %vm1085 = vcmp.eq.f32.partialorder %v1084, 8.507059e+37
        %v1086 = vand.u32 %v1039, 2147483648
        %v1087 = vor.u32 1.1754944e-38, %v1086
        %v1088 = vsel %vm1085, %v1087, %v1083
        %v1089 = vmul.f32 1.0, %v1088
        %v1090 = vrcp.pop %v1040
        %v1091 = vmul.f32 %v1040, %v1090
        %v1092 = vsub.f32 1.0, %v1091
        %v1093 = vmul.f32 %v1090, %v1092
        %v1094 = vadd.f32 %v1090, %v1093
        %vm1095 = vweird.f32 %v1040
        %vm1096 = vweird.f32 %v1090
        %vm1097 = vmor %vm1095, %vm1096
        %v1098 = vsel %vm1097, %v1090, %v1094
        %v1099 = vand.u32 2147483647, %v1040
        %vm1100 = vcmp.eq.f32.partialorder %v1099, 8.507059e+37
        %v1101 = vand.u32 %v1040, 2147483648
        %v1102 = vor.u32 1.1754944e-38, %v1101
        %v1103 = vsel %vm1100, %v1102, %v1098
        %v1104 = vmul.f32 1.0, %v1103
        %v1105 = vrcp.pop %v1041
        %v1106 = vmul.f32 %v1041, %v1105
        %v1107 = vsub.f32 1.0, %v1106
        %v1108 = vmul.f32 %v1105, %v1107
        %v1109 = vadd.f32 %v1105, %v1108
        %vm1110 = vweird.f32 %v1041
        %vm1111 = vweird.f32 %v1105
        %vm1112 = vmor %vm1110, %vm1111
        %v1113 = vsel %vm1112, %v1105, %v1109
        %v1114 = vand.u32 2147483647, %v1041
        %vm1115 = vcmp.eq.f32.partialorder %v1114, 8.507059e+37
        %v1116 = vand.u32 %v1041, 2147483648
        %v1117 = vor.u32 1.1754944e-38, %v1116
        %v1118 = vsel %vm1115, %v1117, %v1113
        %v1119 = vmul.f32 1.0, %v1118
        %v1120 = vrcp.pop %v1042
        %v1121 = vmul.f32 %v1042, %v1120
        %v1122 = vsub.f32 1.0, %v1121
        %v1123 = vmul.f32 %v1120, %v1122
        %v1124 = vadd.f32 %v1120, %v1123
        %vm1125 = vweird.f32 %v1042
        %vm1126 = vweird.f32 %v1120
        %vm1127 = vmor %vm1125, %vm1126
        %v1128 = vsel %vm1127, %v1120, %v1124
        %v1129 = vand.u32 2147483647, %v1042
        %vm1130 = vcmp.eq.f32.partialorder %v1129, 8.507059e+37
        %v1131 = vand.u32 %v1042, 2147483648
        %v1132 = vor.u32 1.1754944e-38, %v1131
        %v1133 = vsel %vm1130, %v1132, %v1128
        %v1134 = vmul.f32 1.0, %v1133
        %v1135 = vrcp.pop %v1043
        %v1136 = vmul.f32 %v1043, %v1135
        %v1137 = vsub.f32 1.0, %v1136
        %v1138 = vmul.f32 %v1135, %v1137
        %v1139 = vadd.f32 %v1135, %v1138
        %vm1140 = vweird.f32 %v1043
        %vm1141 = vweird.f32 %v1135
        %vm1142 = vmor %vm1140, %vm1141
        %v1143 = vsel %vm1142, %v1135, %v1139
        %v1144 = vand.u32 2147483647, %v1043
        %vm1145 = vcmp.eq.f32.partialorder %v1144, 8.507059e+37
        %v1146 = vand.u32 %v1043, 2147483648
        %v1147 = vor.u32 1.1754944e-38, %v1146
        %v1148 = vsel %vm1145, %v1147, %v1143
        %v1149 = vmul.f32 1.0, %v1148
        %v1150 = vrcp.pop %v1044
        %v1151 = vmul.f32 %v1044, %v1150
        %v1152 = vsub.f32 1.0, %v1151
        %v1153 = vmul.f32 %v1150, %v1152
        %v1154 = vadd.f32 %v1150, %v1153
        %vm1155 = vweird.f32 %v1044
        %vm1156 = vweird.f32 %v1150
        %vm1157 = vmor %vm1155, %vm1156
        %v1158 = vsel %vm1157, %v1150, %v1154
        %v1159 = vand.u32 2147483647, %v1044
        %vm1160 = vcmp.eq.f32.partialorder %v1159, 8.507059e+37
        %v1161 = vand.u32 %v1044, 2147483648
        %v1162 = vor.u32 1.1754944e-38, %v1161
        %v1163 = vsel %vm1160, %v1162, %v1158
        %v1164 = vmul.f32 1.0, %v1163
        %v1165 = vmul.f32 %v1059, 1.0614054
        %v1166 = vmul.f32 %v1074, 1.0614054
        %v1167 = vmul.f32 %v1089, 1.0614054
        %v1168 = vmul.f32 %v1104, 1.0614054
        %v1169 = vmul.f32 %v1119, 1.0614054
        %v1170 = vmul.f32 %v1134, 1.0614054
        %v1171 = vmul.f32 %v1149, 1.0614054
        %v1172 = vmul.f32 %v1164, 1.0614054
        %v1173 = vadd.f32 %v1165, -1.4531521
        %v1174 = vadd.f32 %v1166, -1.4531521
        %v1175 = vadd.f32 %v1167, -1.4531521
        %v1176 = vadd.f32 %v1168, -1.4531521
        %v1177 = vadd.f32 %v1169, -1.4531521
        %v1178 = vadd.f32 %v1170, -1.4531521
        %v1179 = vadd.f32 %v1171, -1.4531521
        %v1180 = vadd.f32 %v1172, -1.4531521
        %v1181 = vmul.f32 %v1173, %v1059
        %v1182 = vmul.f32 %v1174, %v1074
        %v1183 = vmul.f32 %v1175, %v1089
        %v1184 = vmul.f32 %v1176, %v1104
        %v1185 = vmul.f32 %v1177, %v1119
        %v1186 = vmul.f32 %v1178, %v1134
        %v1187 = vmul.f32 %v1179, %v1149
        %v1188 = vmul.f32 %v1180, %v1164
        %v1189 = vadd.f32 %v1181, 1.4214138
        %v1190 = vadd.f32 %v1182, 1.4214138
        %v1191 = vadd.f32 %v1183, 1.4214138
        %v1192 = vadd.f32 %v1184, 1.4214138
        %v1193 = vadd.f32 %v1185, 1.4214138
        %v1194 = vadd.f32 %v1186, 1.4214138
        %v1195 = vadd.f32 %v1187, 1.4214138
        %v1196 = vadd.f32 %v1188, 1.4214138
        %v1197 = vmul.f32 %v1189, %v1059
        %v1198 = vmul.f32 %v1190, %v1074
        %v1199 = vmul.f32 %v1191, %v1089
        %v1200 = vmul.f32 %v1192, %v1104
        %v1201 = vmul.f32 %v1193, %v1119
        %v1202 = vmul.f32 %v1194, %v1134
        %v1203 = vmul.f32 %v1195, %v1149
        %v1204 = vmul.f32 %v1196, %v1164
        %v1205 = vadd.f32 %v1197, -0.28449672
        %v1206 = vadd.f32 %v1198, -0.28449672
        %v1207 = vadd.f32 %v1199, -0.28449672
        %v1208 = vadd.f32 %v1200, -0.28449672
        %v1209 = vadd.f32 %v1201, -0.28449672
        %v1210 = vadd.f32 %v1202, -0.28449672
        %v1211 = vadd.f32 %v1203, -0.28449672
        %v1212 = vadd.f32 %v1204, -0.28449672
        %v1213 = vmul.f32 %v1205, %v1059
        %v1214 = vmul.f32 %v1206, %v1074
        %v1215 = vmul.f32 %v1207, %v1089
        %v1216 = vmul.f32 %v1208, %v1104
        %v1217 = vmul.f32 %v1209, %v1119
        %v1218 = vmul.f32 %v1210, %v1134
        %v1219 = vmul.f32 %v1211, %v1149
        %v1220 = vmul.f32 %v1212, %v1164
        %v1221 = vadd.f32 %v1213, 0.2548296
        %v1222 = vadd.f32 %v1214, 0.2548296
        %v1223 = vadd.f32 %v1215, 0.2548296
        %v1224 = vadd.f32 %v1216, 0.2548296
        %v1225 = vadd.f32 %v1217, 0.2548296
        %v1226 = vadd.f32 %v1218, 0.2548296
        %v1227 = vadd.f32 %v1219, 0.2548296
        %v1228 = vadd.f32 %v1220, 0.2548296
        %v1229 = vmul.f32 %v1221, %v1059
        %v1230 = vmul.f32 %v1222, %v1074
        %v1231 = vmul.f32 %v1223, %v1089
        %v1232 = vmul.f32 %v1224, %v1104
        %v1233 = vmul.f32 %v1225, %v1119
        %v1234 = vmul.f32 %v1226, %v1134
        %v1235 = vmul.f32 %v1227, %v1149
        %v1236 = vmul.f32 %v1228, %v1164
        %v1237 = vsub.f32 0.0, %v1021
        %v1238 = vsub.f32 0.0, %v1022
        %v1239 = vsub.f32 0.0, %v1023
        %v1240 = vsub.f32 0.0, %v1024
        %v1241 = vsub.f32 0.0, %v1025
        %v1242 = vsub.f32 0.0, %v1026
        %v1243 = vsub.f32 0.0, %v1027
        %v1244 = vsub.f32 0.0, %v1028
        %v1245 = vmul.f32 %v1237, %v1021
        %v1246 = vmul.f32 %v1238, %v1022
        %v1247 = vmul.f32 %v1239, %v1023
        %v1248 = vmul.f32 %v1240, %v1024
        %v1249 = vmul.f32 %v1241, %v1025
        %v1250 = vmul.f32 %v1242, %v1026
        %v1251 = vmul.f32 %v1243, %v1027
        %v1252 = vmul.f32 %v1244, %v1028
        %v1253 = vmul.f32 %v1245, 1.442695
        %v1254 = vpow.pop %v1253
        %v1255 = vmul.f32 %v1246, 1.442695
        %v1256 = vpow.pop %v1255
        %v1257 = vmul.f32 %v1247, 1.442695
        %v1258 = vpow.pop %v1257
        %v1259 = vmul.f32 %v1248, 1.442695
        %v1260 = vpow.pop %v1259
        %v1261 = vmul.f32 %v1249, 1.442695
        %v1262 = vpow.pop %v1261
        %v1263 = vmul.f32 %v1250, 1.442695
        %v1264 = vpow.pop %v1263
        %v1265 = vmul.f32 %v1251, 1.442695
        %v1266 = vpow.pop %v1265
        %v1267 = vmul.f32 %v1252, 1.442695
        %v1268 = vpow.pop %v1267
        %v1269 = vmul.f32 %v1229, %v1254
        %v1270 = vmul.f32 %v1230, %v1256
        %v1271 = vmul.f32 %v1231, %v1258
        %v1272 = vmul.f32 %v1232, %v1260
        %v1273 = vmul.f32 %v1233, %v1262
        %v1274 = vmul.f32 %v1234, %v1264
        %v1275 = vmul.f32 %v1235, %v1266
        %v1276 = vmul.f32 %v1236, %v1268
        %v1277 = vsub.f32 1.0, %v1269
        %v1278 = vsub.f32 1.0, %v1270
        %v1279 = vsub.f32 1.0, %v1271
        %v1280 = vsub.f32 1.0, %v1272
        %v1281 = vsub.f32 1.0, %v1273
        %v1282 = vsub.f32 1.0, %v1274
        %v1283 = vsub.f32 1.0, %v1275
        %v1284 = vsub.f32 1.0, %v1276
        %vm1285 = vcmp.ge.f32.partialorder %v1013, 0.0
        %vm1286 = vcmp.ge.f32.partialorder %v1014, 0.0
        %vm1287 = vcmp.ge.f32.partialorder %v1015, 0.0
        %vm1288 = vcmp.ge.f32.partialorder %v1016, 0.0
        %vm1289 = vcmp.ge.f32.partialorder %v1017, 0.0
        %vm1290 = vcmp.ge.f32.partialorder %v1018, 0.0
        %vm1291 = vcmp.ge.f32.partialorder %v1019, 0.0
        %vm1292 = vcmp.ge.f32.partialorder %v1020, 0.0
        %v1293 = vsub.f32 0.0, %v1277
        %v1294 = vsub.f32 0.0, %v1278
        %v1295 = vsub.f32 0.0, %v1279
        %v1296 = vsub.f32 0.0, %v1280
        %v1297 = vsub.f32 0.0, %v1281
        %v1298 = vsub.f32 0.0, %v1282
        %v1299 = vsub.f32 0.0, %v1283
        %v1300 = vsub.f32 0.0, %v1284
        %v1301 = vsel %vm1285, %v1277, %v1293
        %v1302 = vsel %vm1286, %v1278, %v1294
        %v1303 = vsel %vm1287, %v1279, %v1295
        %v1304 = vsel %vm1288, %v1280, %v1296
        %v1305 = vsel %vm1289, %v1281, %v1297
        %v1306 = vsel %vm1290, %v1282, %v1298
        %v1307 = vsel %vm1291, %v1283, %v1299
        %v1308 = vsel %vm1292, %v1284, %v1300
        %v1309 = vadd.f32 %v1301, 1.0
        %v1310 = vadd.f32 %v1302, 1.0
        %v1311 = vadd.f32 %v1303, 1.0
        %v1312 = vadd.f32 %v1304, 1.0
        %v1313 = vadd.f32 %v1305, 1.0
        %v1314 = vadd.f32 %v1306, 1.0
        %v1315 = vadd.f32 %v1307, 1.0
        %v1316 = vadd.f32 %v1308, 1.0
        %v1317 = vmul.f32 %v1005, %v1309
        %v1318 = vmul.f32 %v1006, %v1310
        %v1319 = vmul.f32 %v1007, %v1311
        %v1320 = vmul.f32 %v1008, %v1312
        %v1321 = vmul.f32 %v1009, %v1313
        %v1322 = vmul.f32 %v1010, %v1314
        %v1323 = vmul.f32 %v1011, %v1315
        %v1324 = vmul.f32 %v1012, %v1316
        %v1325 = vld [vmem:[%s8] sm:$0xff]
        %v1326 = vld [vmem:[%s8 + $0x8] sm:$0xff]
        %v1327 = vld [vmem:[%s9] sm:$0xff]
        %v1328 = vld [vmem:[%s9 + $0x8] sm:$0xff]
        %1330 = vset.pattern.permute.xlu0 0
        %1331 = vperm.xlu0 %1330, %v1327
        %v1332 = vpop.permute.xlu0 %1331
        %1335 = vset.pattern.permute.xlu0 0
        %1336 = vperm.xlu0 %1335, %v1328
        %v1337 = vpop.permute.xlu0 %1336
        %v1340 = vsel %vm747, %v1325, 0
        %v1343 = vsel %vm747, %v1326, 0
        %1345 = vmatpush.msra.mxu0 0.0
        %1346 = vmatpush.msra.mxu0 0.0
        %1347 = vmatpush.msra.mxu0 0.0
        %1348 = vmatpush.msra.mxu0 0.0
        %1349 = vmatpush.msra.mxu0 0.0
        %1350 = vmatpush.msra.mxu0 0.0
        %1351 = vmatpush.msra.mxu0 0.0
        %1352 = vmatpush.msra.mxu0 0.0
        %1353 = vmatpush.msra.mxu0 0.0
        %1354 = vmatpush.msra.mxu0 0.0
        %1355 = vmatpush.msra.mxu0 0.0
        %1356 = vmatpush.msra.mxu0 0.0
        %1357 = vmatpush.msra.mxu0 %v1323
        %1358 = vmatpush.msra.mxu0 %v1321
        %1359 = vmatpush.msra.mxu0 %v1319
        %1360 = vmatpush.msra.mxu0 %v1317
        %1361 = vmatmul.f32.gmra.mxu0 %v1340
        %v1362 = vpop.f32.mrf.mxu0
        %v1363 = vadd.f32 %v1332, %v1362
        %1364 = vmatmul.f32.gmra.mxu0 %v1343
        %v1365 = vpop.f32.mrf.mxu0
        %v1366 = vadd.f32 %v1337, %v1365
        %1367 = vdwg.mxu0
        %1368 = vmatpush.msra.mxu0 0.0
        %1369 = vmatpush.msra.mxu0 0.0
        %1370 = vmatpush.msra.mxu0 0.0
        %1371 = vmatpush.msra.mxu0 0.0
        %1372 = vmatpush.msra.mxu0 0.0
        %1373 = vmatpush.msra.mxu0 0.0
        %1374 = vmatpush.msra.mxu0 0.0
        %1375 = vmatpush.msra.mxu0 0.0
        %1376 = vmatpush.msra.mxu0 0.0
        %1377 = vmatpush.msra.mxu0 0.0
        %1378 = vmatpush.msra.mxu0 0.0
        %1379 = vmatpush.msra.mxu0 0.0
        %1380 = vmatpush.msra.mxu0 %v1324
        %1381 = vmatpush.msra.mxu0 %v1322
        %1382 = vmatpush.msra.mxu0 %v1320
        %1383 = vmatpush.msra.mxu0 %v1318
        %1384 = vmatmul.f32.gmra.mxu0 %v1340
        %v1385 = vpop.f32.mrf.mxu0
        %v1386 = vadd.f32 %v1332, %v1385
        %1387 = vmatmul.f32.gmra.mxu0 %v1343
        %v1388 = vpop.f32.mrf.mxu0
        %v1389 = vadd.f32 %v1337, %v1388
        %1390 = vdwg.mxu0
        %v1391 = vadd.f32 %v903, %v1363
        %v1392 = vadd.f32 %v904, %v1386
        %v1393 = vadd.f32 %v905, %v1366
        %v1394 = vadd.f32 %v906, %v1389
        %1395 = vst [vmem:[%s352] sm:$0xff] %v1391
        %1396 = vst [vmem:[%s352 + $0x8] sm:$0xff] %v1392
        %1397 = vst [vmem:[%s352 + $0x10] sm:$0xff] %v1393
        %1398 = vst [vmem:[%s352 + $0x18] sm:$0xff] %v1394
        %s1399 = sand.u32 %s247, 1
        %s1400 = scalar_lea.sflag [#allocation4], %s1399
        %s1401 = sand.u32 %s247, 1
        %s1402 = smul.addr %s1401, 32
        %s1403 = scalar_lea.vmem [#allocation3], %s1402
        // Predicated region
        $region61: #{tpu_custom_call.1} parent=59 // pred_check
          %p1404 = pneg %p257
        $region62: #{tpu_custom_call.1} parent=59 // pred_check_branch
          %1406 = sbr.rel (%p1404) target = $region64
        $region63: #{tpu_custom_call.1} parent=59 // pred_region
          %1408 = vsyncadd %s1400, 0
          %s1409 = smul.addr %s24, 4
          %s1410 = smul.addr %s1409, 8
          %s1411 = scalar_lea.hbm %s10, %s1410
          %s1412 = sshll.u32 %s1403, 4
          %s1413 = int_to_ptr.vmem [resolvable:$true] %s1412
          %s1414 = sshll.u32 %s1411, 4
          %s1415 = int_to_ptr.hbm [resolvable:$true] %s1414
          %1420 = dma.vmem_to_hbm [thread:$0]  %s1413, 512, %s1415, %s1400, 256, 256, 16
        $region64: #{tpu_custom_call.1} parent=59 // pred_fallthru
          _
      $region60: #{tpu_custom_call.1} parent=5 // pred_fallthru
        _
      %p1421 = scmp.le.s32.totalorder 2, %s19
      // Predicated region
      $region65: #{tpu_custom_call.1} parent=5 // pred_check
        %p1422 = pneg %p1421
      $region66: #{tpu_custom_call.1} parent=5 // pred_check_branch
        %1424 = sbr.rel (%p1422) target = $region68
      $region67: #{tpu_custom_call.1} parent=5 // pred_region
        %s1425 = ssub.s32 %s19, 2
        // Predicated region
        $region69: #{tpu_custom_call.1} parent=67 // pred_check
          %p1426 = pneg %p263
        $region70: #{tpu_custom_call.1} parent=67 // pred_check_branch
          %1428 = sbr.rel (%p1426) target = $region72
        $region71: #{tpu_custom_call.1} parent=67 // pred_region
          %s1429 = sand.u32 %s248, 1
          %s1430 = scalar_lea.sflag [#allocation4], %s1429
          %s1431 = sand.u32 %s248, 1
          %s1432 = smul.addr %s1431, 32
          %s1433 = scalar_lea.vmem [#allocation3], %s1432
          %1435 = dma.done %s1430, 512
        $region72: #{tpu_custom_call.1} parent=67 // pred_fallthru
          _
      $region68: #{tpu_custom_call.1} parent=5 // pred_fallthru
        _
    $region6: #{tpu_custom_call.1} parent=1 // loop_footer
      %s23 = sadd.s32 1, %s19
    $region7: #{tpu_custom_call.1} parent=1 // loop_footer_branch
      %18 = sbr.rel target = $region3
    $region8: #{tpu_custom_call.1} parent=1 // loop_exit
      _
    %1436 = vsyncpa [#allocation4], 1
    %s1437 = scalar_lea.sflag [#allocation4], 1
    %1438 = vsyncpa %s1437, 1

</llo_original>
